<compile_context>
chip_gen: v7x
topology: tpu7x:2x2x1
jax: 0.10.0
libtpu: 0.0.40
codegen_flags: <defaults>
</compile_context>

<pallas_src>
import jax
import jax.numpy as jnp
import numpy as np
from jax import lax
from jax.experimental import pallas as pl
from jax.experimental.pallas import tpu as pltpu


def center_kernel(x_ref, w1_ref, w2_ref, w3_ref, st_ref, b3_ref, o_ref):
    # Per-grid-step shapes (one batch element per step):
    #   x  : (1, 4*Cin, Hp, Wp) bf16   stride-2 parity planes of the zero-padded input,
    #                                  parity-major on the channel axis (ee|eo|oe|oo)
    #   w1 : (Cm, 9*Cin) bf16          conv1 weights, K ordered (kh, kw, cin)
    #   w2 : (Cm, 9*Cm)  bf16          conv2 weights, K ordered (kh, kw, cm)
    #   w3 : (Cout, Cm)  bf16          conv3 1x1 weights
    #   st : (Cm, 4) f32               folded BN columns [s1 | t1 | s2 | t2]
    #   b3 : (Cout, 1) f32             conv3 bias column
    #   o  : (1, Cout, H1*W1) f32      lane-dense NCHW output slab
    _, C4, Hp, Wp = x_ref.shape
    Cm = w1_ref.shape[0]
    Cin = w1_ref.shape[1] // 9
    Cout = o_ref.shape[1]
    H1, W1 = Hp - 1, Wp - 1
    M = H1 * W1

    x = x_ref[...][0]                       # (4*Cin, Hp, Wp) bf16
    st = st_ref[...]                        # (Cm, 4) f32

    # ---- conv1: 3x3, stride 2, pad 1, no bias -> one (Cm,9Cin)@(9Cin,M) MXU matmul ----
    taps1 = []
    for kh in range(3):
        for kw in range(3):
            p = (kh % 2) * 2 + (kw % 2)     # parity plane index (ee, eo, oe, oo)
            a, b = kh // 2, kw // 2
            taps1.append(x[p * Cin:(p + 1) * Cin, a:a + H1, b:b + W1])  # (Cin, H1, W1)
    p1 = jnp.concatenate(taps1, axis=0).reshape(9 * Cin, M)            # bf16
    acc1 = jnp.dot(w1_ref[...], p1, preferred_element_type=jnp.float32)  # (Cm, M) f32
    y1 = jnp.maximum(acc1 * st[:, 0:1] + st[:, 1:2], 0.0)                # BN1 + ReLU

    # ---- conv2: 3x3, stride 1, pad 1, no bias -> zero halo in registers (bf16) ----
    y1b = y1.astype(jnp.bfloat16).reshape(Cm, H1, W1)
    zr = jnp.zeros((Cm, 1, W1), jnp.bfloat16)
    zc = jnp.zeros((Cm, H1 + 2, 1), jnp.bfloat16)
    y1p = jnp.concatenate([zr, y1b, zr], axis=1)                       # pad rows
    y1p = jnp.concatenate([zc, y1p, zc], axis=2)                       # pad cols
    taps2 = [y1p[:, kh:kh + H1, kw:kw + W1] for kh in range(3) for kw in range(3)]
    p2 = jnp.concatenate(taps2, axis=0).reshape(9 * Cm, M)             # bf16
    acc2 = jnp.dot(w2_ref[...], p2, preferred_element_type=jnp.float32)  # (Cm, M) f32
    y2 = jnp.maximum(acc2 * st[:, 2:3] + st[:, 3:4], 0.0)                # BN2 + ReLU

    # ---- conv3: 1x1, stride 1, with bias ----
    y3 = jnp.dot(w3_ref[...], y2.astype(jnp.bfloat16),
                 preferred_element_type=jnp.float32) + b3_ref[...]       # (Cout, M) f32

    # Lane-dense, natively-NCHW store: (1, Cout, H1*W1).
    o_ref[...] = y3[None].astype(o_ref.dtype)


def center_forward(x_nchw, params):
    """CenterModule forward. x_nchw: (B, Cin, H, W) float32. Returns (B, Cout, H//2, W//2)."""
    (w1, g1, be1, rm1, rv1, w2, g2, be2, rm2, rv2, w3, b3) = params
    B, Cin, H, W = x_nchw.shape
    assert H % 2 == 0 and W % 2 == 0, "stride-2 parity split assumes even H, W"
    Cm = w1.shape[0]
    Cout = w3.shape[0]
    H1, W1 = H // 2, W // 2
    Hp, Wp = H1 + 1, W1 + 1
    eps = 1e-5

    # --- glue: zero-pad (padding=1), parity split (space-to-depth), stack parities ---
    x = x_nchw.astype(jnp.bfloat16)                                   # NCHW bf16
    xp = jnp.pad(x, ((0, 0), (0, 0), (1, 1), (1, 1)))
    x_ee = xp[:, :, 0::2, 0::2]
    x_eo = xp[:, :, 0::2, 1::2]
    x_oe = xp[:, :, 1::2, 0::2]
    x_oo = xp[:, :, 1::2, 1::2]
    x_par = jnp.stack([x_ee, x_eo, x_oe, x_oo], axis=1).reshape(B, 4 * Cin, Hp, Wp)

    # --- glue: weights OIHW -> (O, 9*I) transposed-im2col (bf16), folded BN, bias ---
    w1_t = jnp.transpose(w1, (0, 2, 3, 1)).reshape(Cm, 9 * Cin).astype(jnp.bfloat16)
    w2_t = jnp.transpose(w2, (0, 2, 3, 1)).reshape(Cm, 9 * Cm).astype(jnp.bfloat16)
    w3_t = w3.reshape(Cout, Cm).astype(jnp.bfloat16)
    b3_col = b3.reshape(Cout, 1).astype(jnp.float32)
    inv1 = g1 / jnp.sqrt(rv1 + eps)
    inv2 = g2 / jnp.sqrt(rv2 + eps)
    st = jnp.stack([inv1, be1 - rm1 * inv1, inv2, be2 - rm2 * inv2],
                   axis=-1).astype(jnp.float32)                       # (Cm, 4)

    def wspec(shape):
        return pl.BlockSpec(shape, lambda b: (0,) * len(shape))

    out_slab = pl.pallas_call(
        center_kernel,
        out_shape=jax.ShapeDtypeStruct((B, Cout, H1 * W1), jnp.float32),
        grid_spec=pltpu.PrefetchScalarGridSpec(
            num_scalar_prefetch=0,
            grid=(B,),
            in_specs=[
                pl.BlockSpec((1, 4 * Cin, Hp, Wp), lambda b: (b, 0, 0, 0)),  # parity x
                wspec((Cm, 9 * Cin)),      # w1 (transposed im2col)
                wspec((Cm, 9 * Cm)),       # w2 (transposed im2col)
                wspec((Cout, Cm)),         # w3
                wspec((Cm, 4)),            # [s1|t1|s2|t2]
                wspec((Cout, 1)),          # b3
            ],
            out_specs=pl.BlockSpec((1, Cout, H1 * W1), lambda b: (b, 0, 0)),
        ),
        compiler_params=pltpu.CompilerParams(
            dimension_semantics=("parallel",),
            vmem_limit_bytes=48 * 1024 * 1024,   # fits v7x 64 MiB; > v5e 16 MiB default
        ),
    )(x_par, w1_t, w2_t, w3_t, st, b3_col)

    # (B, Cout, H1*W1) is already NCHW order — a reshape, no transpose / extra HBM pass.
    return out_slab.reshape(B, Cout, H1, W1)


def init_params(key, cin, cm, cout):
    ks = jax.random.split(key, 12)
    w1 = jax.random.normal(ks[0], (cm, cin, 3, 3), jnp.float32) * 0.2     # conv1 (OIHW)
    g1 = 0.5 + jax.random.uniform(ks[1], (cm,), jnp.float32)              # BN1 gamma
    be1 = jax.random.normal(ks[2], (cm,), jnp.float32) * 0.1              # BN1 beta
    rm1 = jax.random.normal(ks[3], (cm,), jnp.float32) * 0.1              # BN1 running_mean
    rv1 = 0.5 + jax.random.uniform(ks[4], (cm,), jnp.float32)             # BN1 running_var
    w2 = jax.random.normal(ks[5], (cm, cm, 3, 3), jnp.float32) * 0.2      # conv2 (OIHW)
    g2 = 0.5 + jax.random.uniform(ks[6], (cm,), jnp.float32)
    be2 = jax.random.normal(ks[7], (cm,), jnp.float32) * 0.1
    rm2 = jax.random.normal(ks[8], (cm,), jnp.float32) * 0.1
    rv2 = 0.5 + jax.random.uniform(ks[9], (cm,), jnp.float32)
    w3 = jax.random.normal(ks[10], (cout, cm, 1, 1), jnp.float32) * 0.2   # conv3 (OIHW)
    b3 = jax.random.normal(ks[11], (cout,), jnp.float32) * 0.1            # conv3 bias
    return (w1, g1, be1, rm1, rv1, w2, g2, be2, rm2, rv2, w3, b3)


def reference_forward(x, params, *, mxu_dtype=None):
    """Plain-JAX reference mirroring the PyTorch module (BN in eval mode).

    mxu_dtype=jnp.bfloat16 reproduces the kernel's bf16 MXU-operand precision
    (f32 accumulation); mxu_dtype=None is the pure-f32 module semantics.
    """
    (w1, g1, be1, rm1, rv1, w2, g2, be2, rm2, rv2, w3, b3) = params
    eps = 1e-5
    dn = ('NCHW', 'OIHW', 'NCHW')
    c = (lambda a: a) if mxu_dtype is None else (lambda a: a.astype(mxu_dtype))

    def bn(y, g, be, rm, rv):
        shp = (1, -1, 1, 1)
        return (y - rm.reshape(shp)) * (g.reshape(shp) / jnp.sqrt(rv.reshape(shp) + eps)) + be.reshape(shp)

    y = lax.conv_general_dilated(c(x), c(w1), (2, 2), ((1, 1), (1, 1)),
                                 dimension_numbers=dn, preferred_element_type=jnp.float32)
    y = jnp.maximum(bn(y, g1, be1, rm1, rv1), 0.0)
    y = lax.conv_general_dilated(c(y), c(w2), (1, 1), ((1, 1), (1, 1)),
                                 dimension_numbers=dn, preferred_element_type=jnp.float32)
    y = jnp.maximum(bn(y, g2, be2, rm2, rv2), 0.0)
    y = lax.conv_general_dilated(c(y), c(w3), (1, 1), ((0, 0), (0, 0)),
                                 dimension_numbers=dn, preferred_element_type=jnp.float32)
    return y + b3.reshape(1, -1, 1, 1)


if __name__ == "__main__":
    B, Cin, H, W = 2, 4, 16, 16          # inplanes=4
    Cm, Cout = 8, 4                      # interplanes=8, outplanes=4, stride=2, upsampling=1
    key = jax.random.PRNGKey(0)
    kx, kp = jax.random.split(key)
    x = jax.random.normal(kx, (B, Cin, H, W), jnp.float32)
    params = init_params(kp, Cin, Cm, Cout)

    out = jax.block_until_ready(center_forward(x, params))

    # Tight check vs. a precision-matched (bf16 MXU operands, f32 accum) reference.
    ref_bf16 = reference_forward(x, params, mxu_dtype=jnp.bfloat16)
    np.testing.assert_allclose(np.asarray(out), np.asarray(ref_bf16), rtol=1e-2, atol=1e-2)

    # Loose sanity check vs. the pure-f32 module semantics.
    ref_f32 = reference_forward(x, params)
    np.testing.assert_allclose(np.asarray(out), np.asarray(ref_f32), rtol=1e-1, atol=1e-1)

    print("KERNEL_OK")
</pallas_src>

<mosaic_0001>
module attributes {stable_mosaic.version = 11 : i64} {
  func.func @center_kernel(%arg0: i32, %arg1: memref<1x16x9x9xbf16, #tpu.memory_space<vmem>>, %arg2: memref<8x36xbf16, #tpu.memory_space<vmem>>, %arg3: memref<8x72xbf16, #tpu.memory_space<vmem>>, %arg4: memref<4x8xbf16, #tpu.memory_space<vmem>>, %arg5: memref<8x4xf32, #tpu.memory_space<vmem>>, %arg6: memref<4x1xf32, #tpu.memory_space<vmem>>, %arg7: memref<1x4x64xf32, #tpu.memory_space<vmem>>) attributes {dimension_semantics = [#tpu.dimension_semantics<parallel>], iteration_bounds = array<i64: 2>, scalar_prefetch = 0 : i64, scratch_operands = 0 : i64, tpu.core_type = #tpu.core_type<tc>, window_params = [{transform_indices = @transform_0, window_bounds = array<i64: 1, 16, 9, 9>}, {pipeline_mode = #tpu.pipeline_mode<synchronous>, transform_indices = @transform_1, window_bounds = array<i64: 8, 36>}, {pipeline_mode = #tpu.pipeline_mode<synchronous>, transform_indices = @transform_2, window_bounds = array<i64: 8, 72>}, {pipeline_mode = #tpu.pipeline_mode<synchronous>, transform_indices = @transform_3, window_bounds = array<i64: 4, 8>}, {pipeline_mode = #tpu.pipeline_mode<synchronous>, transform_indices = @transform_4, window_bounds = array<i64: 8, 4>}, {pipeline_mode = #tpu.pipeline_mode<synchronous>, transform_indices = @transform_5, window_bounds = array<i64: 4, 1>}, {transform_indices = @transform_6, window_bounds = array<i64: 1, 4, 64>}]} {
    %c0 = arith.constant 0 : index
    %c0_0 = arith.constant 0 : index
    %c0_1 = arith.constant 0 : index
    %c0_2 = arith.constant 0 : index
    %0 = vector.load %arg1[%c0, %c0_0, %c0_1, %c0_2] : memref<1x16x9x9xbf16, #tpu.memory_space<vmem>>, vector<1x16x9x9xbf16>
    %1 = vector.shape_cast %0 : vector<1x16x9x9xbf16> to vector<16x9x9xbf16>
    %c0_3 = arith.constant 0 : index
    %c0_4 = arith.constant 0 : index
    %2 = vector.load %arg5[%c0_3, %c0_4] : memref<8x4xf32, #tpu.memory_space<vmem>>, vector<8x4xf32>
    %3 = vector.extract_strided_slice %1 {offsets = [0, 0, 0], sizes = [4, 8, 8], strides = [1, 1, 1]} : vector<16x9x9xbf16> to vector<4x8x8xbf16>
    %4 = vector.extract_strided_slice %1 {offsets = [4, 0, 0], sizes = [4, 8, 8], strides = [1, 1, 1]} : vector<16x9x9xbf16> to vector<4x8x8xbf16>
    %5 = vector.extract_strided_slice %1 {offsets = [0, 0, 1], sizes = [4, 8, 8], strides = [1, 1, 1]} : vector<16x9x9xbf16> to vector<4x8x8xbf16>
    %6 = vector.extract_strided_slice %1 {offsets = [8, 0, 0], sizes = [4, 8, 8], strides = [1, 1, 1]} : vector<16x9x9xbf16> to vector<4x8x8xbf16>
    %7 = vector.extract_strided_slice %1 {offsets = [12, 0, 0], sizes = [4, 8, 8], strides = [1, 1, 1]} : vector<16x9x9xbf16> to vector<4x8x8xbf16>
    %8 = vector.extract_strided_slice %1 {offsets = [8, 0, 1], sizes = [4, 8, 8], strides = [1, 1, 1]} : vector<16x9x9xbf16> to vector<4x8x8xbf16>
    %9 = vector.extract_strided_slice %1 {offsets = [0, 1, 0], sizes = [4, 8, 8], strides = [1, 1, 1]} : vector<16x9x9xbf16> to vector<4x8x8xbf16>
    %10 = vector.extract_strided_slice %1 {offsets = [4, 1, 0], sizes = [4, 8, 8], strides = [1, 1, 1]} : vector<16x9x9xbf16> to vector<4x8x8xbf16>
    %11 = vector.extract_strided_slice %1 {offsets = [0, 1, 1], sizes = [4, 8, 8], strides = [1, 1, 1]} : vector<16x9x9xbf16> to vector<4x8x8xbf16>
    %12 = tpu.concatenate %3, %4, %5, %6, %7, %8, %9, %10, %11 in 0 : vector<4x8x8xbf16>, vector<4x8x8xbf16>, vector<4x8x8xbf16>, vector<4x8x8xbf16>, vector<4x8x8xbf16>, vector<4x8x8xbf16>, vector<4x8x8xbf16>, vector<4x8x8xbf16>, vector<4x8x8xbf16> -> vector<36x8x8xbf16>
    %13 = vector.shape_cast %12 : vector<36x8x8xbf16> to vector<36x64xbf16>
    %c0_5 = arith.constant 0 : index
    %c0_6 = arith.constant 0 : index
    %14 = vector.load %arg2[%c0_5, %c0_6] : memref<8x36xbf16, #tpu.memory_space<vmem>>, vector<8x36xbf16>
    %cst = arith.constant dense<0.000000e+00> : vector<8x64xf32>
    %15 = tpu.matmul %14, %13, %cst {dimension_numbers = #tpu.dot_dimension_numbers<[1], [0], [0], [1], [0, 0, 1, 1], [], []>} : vector<8x36xbf16>, vector<36x64xbf16>, vector<8x64xf32> -> vector<8x64xf32>
    %16 = vector.extract_strided_slice %2 {offsets = [0, 0], sizes = [8, 1], strides = [1, 1]} : vector<8x4xf32> to vector<8x1xf32>
    %17 = vector.broadcast %16 : vector<8x1xf32> to vector<8x64xf32>
    %18 = arith.mulf %15, %17 : vector<8x64xf32>
    %19 = vector.extract_strided_slice %2 {offsets = [0, 1], sizes = [8, 1], strides = [1, 1]} : vector<8x4xf32> to vector<8x1xf32>
    %20 = vector.broadcast %19 : vector<8x1xf32> to vector<8x64xf32>
    %21 = arith.addf %18, %20 : vector<8x64xf32>
    %cst_7 = arith.constant 0.000000e+00 : f32
    %22 = vector.broadcast %cst_7 : f32 to vector<8x64xf32>
    %23 = arith.maximumf %21, %22 : vector<8x64xf32>
    %24 = arith.truncf %23 : vector<8x64xf32> to vector<8x64xbf16>
    %25 = vector.shape_cast %24 : vector<8x64xbf16> to vector<8x8x8xbf16>
    %cst_8 = arith.constant 0.000000e+00 : bf16
    %26 = vector.broadcast %cst_8 : bf16 to vector<8x1x8xbf16>
    %cst_9 = arith.constant 0.000000e+00 : bf16
    %27 = vector.broadcast %cst_9 : bf16 to vector<8x10x1xbf16>
    %28 = tpu.concatenate %26, %25, %26 in 1 : vector<8x1x8xbf16>, vector<8x8x8xbf16>, vector<8x1x8xbf16> -> vector<8x10x8xbf16>
    %29 = tpu.concatenate %27, %28, %27 in 2 : vector<8x10x1xbf16>, vector<8x10x8xbf16>, vector<8x10x1xbf16> -> vector<8x10x10xbf16>
    %30 = vector.extract_strided_slice %29 {offsets = [0, 0, 0], sizes = [8, 8, 8], strides = [1, 1, 1]} : vector<8x10x10xbf16> to vector<8x8x8xbf16>
    %31 = vector.extract_strided_slice %29 {offsets = [0, 0, 1], sizes = [8, 8, 8], strides = [1, 1, 1]} : vector<8x10x10xbf16> to vector<8x8x8xbf16>
    %32 = vector.extract_strided_slice %29 {offsets = [0, 0, 2], sizes = [8, 8, 8], strides = [1, 1, 1]} : vector<8x10x10xbf16> to vector<8x8x8xbf16>
    %33 = vector.extract_strided_slice %29 {offsets = [0, 1, 0], sizes = [8, 8, 8], strides = [1, 1, 1]} : vector<8x10x10xbf16> to vector<8x8x8xbf16>
    %34 = vector.extract_strided_slice %29 {offsets = [0, 1, 1], sizes = [8, 8, 8], strides = [1, 1, 1]} : vector<8x10x10xbf16> to vector<8x8x8xbf16>
    %35 = vector.extract_strided_slice %29 {offsets = [0, 1, 2], sizes = [8, 8, 8], strides = [1, 1, 1]} : vector<8x10x10xbf16> to vector<8x8x8xbf16>
    %36 = vector.extract_strided_slice %29 {offsets = [0, 2, 0], sizes = [8, 8, 8], strides = [1, 1, 1]} : vector<8x10x10xbf16> to vector<8x8x8xbf16>
    %37 = vector.extract_strided_slice %29 {offsets = [0, 2, 1], sizes = [8, 8, 8], strides = [1, 1, 1]} : vector<8x10x10xbf16> to vector<8x8x8xbf16>
    %38 = vector.extract_strided_slice %29 {offsets = [0, 2, 2], sizes = [8, 8, 8], strides = [1, 1, 1]} : vector<8x10x10xbf16> to vector<8x8x8xbf16>
    %39 = tpu.concatenate %30, %31, %32, %33, %34, %35, %36, %37, %38 in 0 : vector<8x8x8xbf16>, vector<8x8x8xbf16>, vector<8x8x8xbf16>, vector<8x8x8xbf16>, vector<8x8x8xbf16>, vector<8x8x8xbf16>, vector<8x8x8xbf16>, vector<8x8x8xbf16>, vector<8x8x8xbf16> -> vector<72x8x8xbf16>
    %40 = vector.shape_cast %39 : vector<72x8x8xbf16> to vector<72x64xbf16>
    %c0_10 = arith.constant 0 : index
    %c0_11 = arith.constant 0 : index
    %41 = vector.load %arg3[%c0_10, %c0_11] : memref<8x72xbf16, #tpu.memory_space<vmem>>, vector<8x72xbf16>
    %cst_12 = arith.constant dense<0.000000e+00> : vector<8x64xf32>
    %42 = tpu.matmul %41, %40, %cst_12 {dimension_numbers = #tpu.dot_dimension_numbers<[1], [0], [0], [1], [0, 0, 1, 1], [], []>} : vector<8x72xbf16>, vector<72x64xbf16>, vector<8x64xf32> -> vector<8x64xf32>
    %43 = vector.extract_strided_slice %2 {offsets = [0, 2], sizes = [8, 1], strides = [1, 1]} : vector<8x4xf32> to vector<8x1xf32>
    %44 = vector.broadcast %43 : vector<8x1xf32> to vector<8x64xf32>
    %45 = arith.mulf %42, %44 : vector<8x64xf32>
    %46 = vector.extract_strided_slice %2 {offsets = [0, 3], sizes = [8, 1], strides = [1, 1]} : vector<8x4xf32> to vector<8x1xf32>
    %47 = vector.broadcast %46 : vector<8x1xf32> to vector<8x64xf32>
    %48 = arith.addf %45, %47 : vector<8x64xf32>
    %cst_13 = arith.constant 0.000000e+00 : f32
    %49 = vector.broadcast %cst_13 : f32 to vector<8x64xf32>
    %50 = arith.maximumf %48, %49 : vector<8x64xf32>
    %c0_14 = arith.constant 0 : index
    %c0_15 = arith.constant 0 : index
    %51 = vector.load %arg4[%c0_14, %c0_15] : memref<4x8xbf16, #tpu.memory_space<vmem>>, vector<4x8xbf16>
    %52 = arith.truncf %50 : vector<8x64xf32> to vector<8x64xbf16>
    %cst_16 = arith.constant dense<0.000000e+00> : vector<4x64xf32>
    %53 = tpu.matmul %51, %52, %cst_16 {dimension_numbers = #tpu.dot_dimension_numbers<[1], [0], [0], [1], [0, 0, 1, 1], [], []>} : vector<4x8xbf16>, vector<8x64xbf16>, vector<4x64xf32> -> vector<4x64xf32>
    %c0_17 = arith.constant 0 : index
    %c0_18 = arith.constant 0 : index
    %54 = vector.load %arg6[%c0_17, %c0_18] : memref<4x1xf32, #tpu.memory_space<vmem>>, vector<4x1xf32>
    %55 = vector.broadcast %54 : vector<4x1xf32> to vector<4x64xf32>
    %56 = arith.addf %53, %55 : vector<4x64xf32>
    %57 = vector.shape_cast %56 : vector<4x64xf32> to vector<1x4x64xf32>
    %c0_19 = arith.constant 0 : index
    %c0_20 = arith.constant 0 : index
    %c0_21 = arith.constant 0 : index
    %58 = vector.load %arg7[%c0_19, %c0_20, %c0_21] : memref<1x4x64xf32, #tpu.memory_space<vmem>>, vector<1x4x64xf32>
    tpu.vector_store %arg7[%c0_19, %c0_20, %c0_21], %57 {strides = array<i32>} : memref<1x4x64xf32, #tpu.memory_space<vmem>>, vector<1x4x64xf32>,
    return
  }
  func.func @transform_0(%arg0: i32) -> (i32, i32, i32, i32) {
    %c0_i32 = arith.constant 0 : i32
    %c0_i32_0 = arith.constant 0 : i32
    %c0_i32_1 = arith.constant 0 : i32
    %c0_i32_2 = arith.constant 0 : i32
    return %arg0, %c0_i32, %c0_i32_0, %c0_i32_1 : i32, i32, i32, i32
  }
  func.func @transform_1(%arg0: i32) -> (i32, i32) {
    %c0_i32 = arith.constant 0 : i32
    %c0_i32_0 = arith.constant 0 : i32
    %c0_i32_1 = arith.constant 0 : i32
    return %c0_i32, %c0_i32_0 : i32, i32
  }
  func.func @transform_2(%arg0: i32) -> (i32, i32) {
    %c0_i32 = arith.constant 0 : i32
    %c0_i32_0 = arith.constant 0 : i32
    %c0_i32_1 = arith.constant 0 : i32
    return %c0_i32, %c0_i32_0 : i32, i32
  }
  func.func @transform_3(%arg0: i32) -> (i32, i32) {
    %c0_i32 = arith.constant 0 : i32
    %c0_i32_0 = arith.constant 0 : i32
    %c0_i32_1 = arith.constant 0 : i32
    return %c0_i32, %c0_i32_0 : i32, i32
  }
  func.func @transform_4(%arg0: i32) -> (i32, i32) {
    %c0_i32 = arith.constant 0 : i32
    %c0_i32_0 = arith.constant 0 : i32
    %c0_i32_1 = arith.constant 0 : i32
    return %c0_i32, %c0_i32_0 : i32, i32
  }
  func.func @transform_5(%arg0: i32) -> (i32, i32) {
    %c0_i32 = arith.constant 0 : i32
    %c0_i32_0 = arith.constant 0 : i32
    %c0_i32_1 = arith.constant 0 : i32
    return %c0_i32, %c0_i32_0 : i32, i32
  }
  func.func @transform_6(%arg0: i32) -> (i32, i32, i32) {
    %c0_i32 = arith.constant 0 : i32
    %c0_i32_0 = arith.constant 0 : i32
    %c0_i32_1 = arith.constant 0 : i32
    return %arg0, %c0_i32, %c0_i32_0 : i32, i32, i32
  }
}

</mosaic_0001>

<llo_original>
// kernel: tpu_custom_call.1
$region0: #{tpu_custom_call.1}
  #allocation0 [shape = 'u32[]', space=smem, size = 0x4, offset = 0x4, fixed_abs, tag = 'smem constant byte address 0x4 - core index']
  #allocation1 [shape = 'u32[144,128]{1,0:T(1,128)}', space=vmem, size = 0x12000, scoped, tag = 'internal scratch']
  %s0 = inlined_call_operand.vmem [shape: bf16[2,16,9,9], index: 0, kind: input, shape index: {}]
  %s1 = inlined_call_operand.vmem [shape: bf16[8,36], index: 1, kind: input, shape index: {}]
  %s2 = inlined_call_operand.vmem [shape: bf16[8,72], index: 2, kind: input, shape index: {}]
  %s3 = inlined_call_operand.vmem [shape: bf16[4,8], index: 3, kind: input, shape index: {}]
  %s4 = inlined_call_operand.vmem [shape: f32[8,4], index: 4, kind: input, shape index: {}]
  %s5 = inlined_call_operand.vmem [shape: f32[4,1], index: 5, kind: input, shape index: {}]
  %s6 = inlined_call_operand.hbm [shape: f32[2,4,64], index: 6, kind: output, shape index: {}]
  %s7 = sld [smem:[#allocation0]]
  $region57: #{tpu_custom_call.1} parent=0
    _
  %s9 = ssub.s32 1, %s7
  %s10 = scalar_select 0, %s9, %s7
  $region1: #{tpu_custom_call.1} parent=0
    #allocation2 [shape = 'u8[4096]{0}', space=vmem, size = 0x1000, scoped, tag = 'output window, operand 0']
    #allocation3 [shape = 's32[2]{0}', space=sflag, size = 0x8, scoped, tag = 'scoped memory for tpu_custom_call.1']
    %11 = vsyncpa [#allocation3], 0
    %s12 = scalar_lea.sflag [#allocation3], 1
    %13 = vsyncpa %s12, 0
    loop: start=0, step=1, limit=4
    $region2: #{tpu_custom_call.1} parent=1 // loop_pre_header
      _
    $region3: #{tpu_custom_call.1} parent=1 // loop_header
      %s15 = sphi 0, %s19
      %p16 = scmp.ge.s32.totalorder %s15, 4
      %s25 = sphi 0, %s27
      %s28 = sphi 0, %s25
      %s29 = sphi 0, %s28
      %s45 = sphi 0, %s29
      %s49 = sphi 0, %s49
      %s51 = sphi 0, %s49
      %s52 = sphi 0, %s51
      %s66 = sphi 0, %s52
      %s70 = sphi 0, %s70
      %s72 = sphi 0, %s70
      %s73 = sphi 0, %s72
      %s87 = sphi 0, %s73
      %s91 = sphi 0, %s91
      %s93 = sphi 0, %s91
      %s94 = sphi 0, %s93
      %s108 = sphi 0, %s94
      %s112 = sphi 0, %s112
      %s114 = sphi 0, %s112
      %s115 = sphi 0, %s114
      %s129 = sphi 0, %s115
      %s133 = sphi 0, %s133
      %s135 = sphi 0, %s133
      %s136 = sphi 0, %s135
      %s150 = sphi 0, %s136
      %s156 = sphi 0, %s158
      %s159 = sphi 0, %s156
      %s160 = sphi 0, %s159
      %s176 = sphi 0, %s160
    $region4: #{tpu_custom_call.1} parent=1 // loop_header_branch
      %18 = sbr.rel (%p16) target = $region8
    $region5: #{tpu_custom_call.1} parent=1 // loop_body
      %s20 = ssub.s32 %s15, 1
      %s21 = ssub.s32 %s15, 2
      %s22 = sadd.s32 %s15, 1
      %s23 = ssub.s32 %s15, %s22
      %p24 = scmp.eq.s32.totalorder %s23, 0
      %s26 = sadd.s32 %s25, 1
      %s27 = scalar_select %p24, %s25, %s26
      %p30 = pneg %p24
      %p31 = scmp.eq.s32.totalorder %s15, 1
      %p32 = por %p30, %p31
      %p33 = scmp.ne.s32.totalorder %s25, %s28
      %p34 = scmp.eq.s32.totalorder %s15, 0
      %p35 = por %p33, %p34
      %p36 = scmp.ne.s32.totalorder %s25, %s28
      %p37 = scmp.eq.s32.totalorder %s20, 1
      %p38 = por %p36, %p37
      %p39 = scmp.ne.s32.totalorder %s28, %s29
      %p40 = scmp.eq.s32.totalorder %s20, 0
      %p41 = por %p39, %p40
      %p42 = scmp.ne.s32.totalorder %s28, %s29
      %p43 = scmp.eq.s32.totalorder %s21, 1
      %p44 = por %p42, %p43
      %p46 = scmp.ne.s32.totalorder %s29, %s45
      %p47 = scmp.eq.s32.totalorder %s21, 0
      %p48 = por %p46, %p47
      %s50 = sadd.s32 %s49, 1
      %p53 = scmp.eq.s32.totalorder %s15, 1
      %p54 = scmp.ne.s32.totalorder %s49, %s51
      %p55 = scmp.eq.s32.totalorder %s15, 0
      %p56 = por %p54, %p55
      %p57 = scmp.ne.s32.totalorder %s49, %s51
      %p58 = scmp.eq.s32.totalorder %s20, 1
      %p59 = por %p57, %p58
      %p60 = scmp.ne.s32.totalorder %s51, %s52
      %p61 = scmp.eq.s32.totalorder %s20, 0
      %p62 = por %p60, %p61
      %p63 = scmp.ne.s32.totalorder %s51, %s52
      %p64 = scmp.eq.s32.totalorder %s21, 1
      %p65 = por %p63, %p64
      %p67 = scmp.ne.s32.totalorder %s52, %s66
      %p68 = scmp.eq.s32.totalorder %s21, 0
      %p69 = por %p67, %p68
      %s71 = sadd.s32 %s70, 1
      %p74 = scmp.eq.s32.totalorder %s15, 1
      %p75 = scmp.ne.s32.totalorder %s70, %s72
      %p76 = scmp.eq.s32.totalorder %s15, 0
      %p77 = por %p75, %p76
      %p78 = scmp.ne.s32.totalorder %s70, %s72
      %p79 = scmp.eq.s32.totalorder %s20, 1
      %p80 = por %p78, %p79
      %p81 = scmp.ne.s32.totalorder %s72, %s73
      %p82 = scmp.eq.s32.totalorder %s20, 0
      %p83 = por %p81, %p82
      %p84 = scmp.ne.s32.totalorder %s72, %s73
      %p85 = scmp.eq.s32.totalorder %s21, 1
      %p86 = por %p84, %p85
      %p88 = scmp.ne.s32.totalorder %s73, %s87
      %p89 = scmp.eq.s32.totalorder %s21, 0
      %p90 = por %p88, %p89
      %s92 = sadd.s32 %s91, 1
      %p95 = scmp.eq.s32.totalorder %s15, 1
      %p96 = scmp.ne.s32.totalorder %s91, %s93
      %p97 = scmp.eq.s32.totalorder %s15, 0
      %p98 = por %p96, %p97
      %p99 = scmp.ne.s32.totalorder %s91, %s93
      %p100 = scmp.eq.s32.totalorder %s20, 1
      %p101 = por %p99, %p100
      %p102 = scmp.ne.s32.totalorder %s93, %s94
      %p103 = scmp.eq.s32.totalorder %s20, 0
      %p104 = por %p102, %p103
      %p105 = scmp.ne.s32.totalorder %s93, %s94
      %p106 = scmp.eq.s32.totalorder %s21, 1
      %p107 = por %p105, %p106
      %p109 = scmp.ne.s32.totalorder %s94, %s108
      %p110 = scmp.eq.s32.totalorder %s21, 0
      %p111 = por %p109, %p110
      %s113 = sadd.s32 %s112, 1
      %p116 = scmp.eq.s32.totalorder %s15, 1
      %p117 = scmp.ne.s32.totalorder %s112, %s114
      %p118 = scmp.eq.s32.totalorder %s15, 0
      %p119 = por %p117, %p118
      %p120 = scmp.ne.s32.totalorder %s112, %s114
      %p121 = scmp.eq.s32.totalorder %s20, 1
      %p122 = por %p120, %p121
      %p123 = scmp.ne.s32.totalorder %s114, %s115
      %p124 = scmp.eq.s32.totalorder %s20, 0
      %p125 = por %p123, %p124
      %p126 = scmp.ne.s32.totalorder %s114, %s115
      %p127 = scmp.eq.s32.totalorder %s21, 1
      %p128 = por %p126, %p127
      %p130 = scmp.ne.s32.totalorder %s115, %s129
      %p131 = scmp.eq.s32.totalorder %s21, 0
      %p132 = por %p130, %p131
      %s134 = sadd.s32 %s133, 1
      %p137 = scmp.eq.s32.totalorder %s15, 1
      %p138 = scmp.ne.s32.totalorder %s133, %s135
      %p139 = scmp.eq.s32.totalorder %s15, 0
      %p140 = por %p138, %p139
      %p141 = scmp.ne.s32.totalorder %s133, %s135
      %p142 = scmp.eq.s32.totalorder %s20, 1
      %p143 = por %p141, %p142
      %p144 = scmp.ne.s32.totalorder %s135, %s136
      %p145 = scmp.eq.s32.totalorder %s20, 0
      %p146 = por %p144, %p145
      %p147 = scmp.ne.s32.totalorder %s135, %s136
      %p148 = scmp.eq.s32.totalorder %s21, 1
      %p149 = por %p147, %p148
      %p151 = scmp.ne.s32.totalorder %s136, %s150
      %p152 = scmp.eq.s32.totalorder %s21, 0
      %p153 = por %p151, %p152
      %s154 = ssub.s32 %s15, %s22
      %p155 = scmp.eq.s32.totalorder %s154, 0
      %s157 = sadd.s32 %s156, 1
      %s158 = scalar_select %p155, %s156, %s157
      %p161 = pneg %p155
      %p162 = scmp.eq.s32.totalorder %s15, 1
      %p163 = por %p161, %p162
      %p164 = scmp.ne.s32.totalorder %s156, %s159
      %p165 = scmp.eq.s32.totalorder %s15, 0
      %p166 = por %p164, %p165
      %p167 = scmp.ne.s32.totalorder %s156, %s159
      %p168 = scmp.eq.s32.totalorder %s20, 1
      %p169 = por %p167, %p168
      %p170 = scmp.ne.s32.totalorder %s159, %s160
      %p171 = scmp.eq.s32.totalorder %s20, 0
      %p172 = por %p170, %p171
      %p173 = scmp.ne.s32.totalorder %s159, %s160
      %p174 = scmp.eq.s32.totalorder %s21, 1
      %p175 = por %p173, %p174
      %p177 = scmp.ne.s32.totalorder %s160, %s176
      %p178 = scmp.eq.s32.totalorder %s21, 0
      %p179 = por %p177, %p178
      %p180 = scmp.le.s32.totalorder 1, %s15
      %p181 = scmp.lt.s32.totalorder %s15, 3
      %p182 = pnand %p180, %p181
      %p183 = pneg %p182
      // Predicated region
      $region9: #{tpu_custom_call.1} parent=5 // pred_check
        _
      $region10: #{tpu_custom_call.1} parent=5 // pred_check_branch
        %185 = sbr.rel (%p182) target = $region12
      $region11: #{tpu_custom_call.1} parent=5 // pred_region
        %s186 = ssub.s32 %s15, 1
        // Predicated region
        $region13: #{tpu_custom_call.1} parent=11 // pred_check
          %p187 = pneg %p62
        $region14: #{tpu_custom_call.1} parent=11 // pred_check_branch
          %189 = sbr.rel (%p187) target = $region16
        $region15: #{tpu_custom_call.1} parent=11 // pred_region
          _
        $region16: #{tpu_custom_call.1} parent=11 // pred_fallthru
          _
        // Predicated region
        $region17: #{tpu_custom_call.1} parent=11 // pred_check
          %p190 = pneg %p83
        $region18: #{tpu_custom_call.1} parent=11 // pred_check_branch
          %192 = sbr.rel (%p190) target = $region20
        $region19: #{tpu_custom_call.1} parent=11 // pred_region
          _
        $region20: #{tpu_custom_call.1} parent=11 // pred_fallthru
          _
        // Predicated region
        $region21: #{tpu_custom_call.1} parent=11 // pred_check
          %p193 = pneg %p104
        $region22: #{tpu_custom_call.1} parent=11 // pred_check_branch
          %195 = sbr.rel (%p193) target = $region24
        $region23: #{tpu_custom_call.1} parent=11 // pred_region
          _
        $region24: #{tpu_custom_call.1} parent=11 // pred_fallthru
          _
        // Predicated region
        $region25: #{tpu_custom_call.1} parent=11 // pred_check
          %p196 = pneg %p125
        $region26: #{tpu_custom_call.1} parent=11 // pred_check_branch
          %198 = sbr.rel (%p196) target = $region28
        $region27: #{tpu_custom_call.1} parent=11 // pred_region
          _
        $region28: #{tpu_custom_call.1} parent=11 // pred_fallthru
          _
        // Predicated region
        $region29: #{tpu_custom_call.1} parent=11 // pred_check
          %p199 = pneg %p146
        $region30: #{tpu_custom_call.1} parent=11 // pred_check_branch
          %201 = sbr.rel (%p199) target = $region32
        $region31: #{tpu_custom_call.1} parent=11 // pred_region
          _
        $region32: #{tpu_custom_call.1} parent=11 // pred_fallthru
          _
      $region12: #{tpu_custom_call.1} parent=5 // pred_fallthru
        _
      %p202 = scmp.lt.s32.totalorder %s15, 2
      // Predicated region
      $region33: #{tpu_custom_call.1} parent=5 // pred_check
        %p203 = pneg %p202
      $region34: #{tpu_custom_call.1} parent=5 // pred_check_branch
        %205 = sbr.rel (%p203) target = $region36
      $region35: #{tpu_custom_call.1} parent=5 // pred_region
        // Predicated region
        $region37: #{tpu_custom_call.1} parent=35 // pred_check
          %p206 = pneg %p35
        $region38: #{tpu_custom_call.1} parent=35 // pred_check_branch
          %208 = sbr.rel (%p206) target = $region40
        $region39: #{tpu_custom_call.1} parent=35 // pred_region
          %p209 = scmp.lt.s32.totalorder %s15, 1
          %s210 = scalar_select %p209, %s15, 1
          %s211 = smul.addr %s210, 32
          %s212 = smul.addr %s211, 4
          %s213 = scalar_lea.vmem %s0, %s212
        $region40: #{tpu_custom_call.1} parent=35 // pred_fallthru
          _
      $region36: #{tpu_custom_call.1} parent=5 // pred_fallthru
        _
      %p214 = scmp.le.s32.totalorder 1, %s15
      %p215 = scmp.lt.s32.totalorder %s15, 3
      %p216 = pnand %p214, %p215
      %p217 = pneg %p216
      // Predicated region
      $region41: #{tpu_custom_call.1} parent=5 // pred_check
        _
      $region42: #{tpu_custom_call.1} parent=5 // pred_check_branch
        %219 = sbr.rel (%p216) target = $region44
      $region43: #{tpu_custom_call.1} parent=5 // pred_region
        %s220 = ssub.s32 %s15, 1
        %p221 = scmp.lt.s32.totalorder %s20, 1
        %s222 = scalar_select %p221, %s20, 1
        %s223 = smul.addr %s222, 32
        %s224 = smul.addr %s223, 4
        %s225 = scalar_lea.vmem %s0, %s224
        %p226 = pneg %p41
        %p227 = pneg %p38
        %p228 = pneg %p62
        %p229 = pneg %p59
        %p230 = pneg %p83
        %p231 = pneg %p80
        %p232 = pneg %p104
        %p233 = pneg %p101
        %p234 = pneg %p125
        %p235 = pneg %p122
        %p236 = pneg %p146
        %p237 = pneg %p143
        %p238 = pneg %p172
        %p239 = pneg %p169
        %s240 = sand.u32 %s159, 1
        %s241 = scalar_lea.sflag [#allocation3], %s240
        %s242 = sand.u32 %s159, 1
        %s243 = smul.addr %s242, 4
        %s244 = scalar_lea.vmem [#allocation2], %s243
        %p245 = scmp.lt.s32.totalorder %s20, 1
        %s246 = scalar_select %p245, %s20, 1
        %s247 = smul.addr %s246, 32
        %s248 = smul.addr %s247, 4
        %s249 = scalar_lea.vmem %s0, %s248
        %v251 = vld [vmem:[%s249] sm:$0xf]
        %v252 = vld [vmem:[%s249 + $0x4] sm:$0x1]
        %v253 = vld [vmem:[%s249 + $0x8] sm:$0xf]
        %v254 = vld [vmem:[%s249 + $0xc] sm:$0x1]
        %v255 = vld [vmem:[%s249 + $0x10] sm:$0xf]
        %v256 = vld [vmem:[%s249 + $0x14] sm:$0x1]
        %v257 = vld [vmem:[%s249 + $0x18] sm:$0xf]
        %v258 = vld [vmem:[%s249 + $0x1c] sm:$0x1]
        %v259 = vld [vmem:[%s249 + $0x20] sm:$0xf]
        %v260 = vld [vmem:[%s249 + $0x24] sm:$0x1]
        %v261 = vld [vmem:[%s249 + $0x28] sm:$0xf]
        %v262 = vld [vmem:[%s249 + $0x2c] sm:$0x1]
        %v263 = vld [vmem:[%s249 + $0x30] sm:$0xf]
        %v264 = vld [vmem:[%s249 + $0x34] sm:$0x1]
        %v265 = vld [vmem:[%s249 + $0x38] sm:$0xf]
        %v266 = vld [vmem:[%s249 + $0x3c] sm:$0x1]
        %v267 = vld [vmem:[%s249 + $0x40] sm:$0xf]
        %v268 = vld [vmem:[%s249 + $0x48] sm:$0xf]
        %v269 = vld [vmem:[%s249 + $0x50] sm:$0xf]
        %v270 = vld [vmem:[%s249 + $0x58] sm:$0xf]
        %v271 = vld [vmem:[%s249 + $0x60] sm:$0xf]
        %v272 = vld [vmem:[%s249 + $0x68] sm:$0xf]
        %v273 = vld [vmem:[%s249 + $0x70] sm:$0xf]
        %v274 = vld [vmem:[%s249 + $0x78] sm:$0xf]
        %v275 = vld [vmem:[%s4] sm:$0xff]
        %280 = vrot.lane.b32.xlu0 %v251, 127
        %v281 = vpop.permute.xlu0 %280
        %282 = vrot.lane.b32.xlu0 %v253, 127
        %v283 = vpop.permute.xlu0 %282
        %284 = vrot.lane.b32.xlu0 %v255, 127
        %v285 = vpop.permute.xlu0 %284
        %286 = vrot.lane.b32.xlu0 %v257, 127
        %v287 = vpop.permute.xlu0 %286
        %292 = vrot.lane.b32.xlu0 %v267, 127
        %v293 = vpop.permute.xlu0 %292
        %294 = vrot.lane.b32.xlu0 %v268, 127
        %v295 = vpop.permute.xlu0 %294
        %296 = vrot.lane.b32.xlu0 %v269, 127
        %v297 = vpop.permute.xlu0 %296
        %298 = vrot.lane.b32.xlu0 %v270, 127
        %v299 = vpop.permute.xlu0 %298
        %vm300 = vsmask.f32 3328
        %vm301 = vsmask.f32 7440
        %vm302 = vmor %vm300, %vm301
        %v304 = vshrl.u32 %v251, 16
        %v306 = vrot.slane %v304, 4
        %v307 = vshll.u32 %v251, 16
        %v309 = vrot.slane %v307, 5
        %v310 = vor.u32 %v306, %v309
        %v311 = vrot.slane %v310, 4
        %v313 = vshll.u32 %v252, 16
        %v315 = vrot.slane %v313, 5
        %v316 = vsel %vm302, %v311, %v315
        %v318 = vshrl.u32 %v253, 16
        %v320 = vrot.slane %v318, 4
        %v321 = vshll.u32 %v253, 16
        %v323 = vrot.slane %v321, 5
        %v324 = vor.u32 %v320, %v323
        %v325 = vrot.slane %v324, 4
        %v327 = vshll.u32 %v254, 16
        %v329 = vrot.slane %v327, 5
        %v330 = vsel %vm302, %v325, %v329
        %v332 = vshrl.u32 %v255, 16
        %v334 = vrot.slane %v332, 4
        %v335 = vshll.u32 %v255, 16
        %v337 = vrot.slane %v335, 5
        %v338 = vor.u32 %v334, %v337
        %v339 = vrot.slane %v338, 4
        %v341 = vshll.u32 %v256, 16
        %v343 = vrot.slane %v341, 5
        %v344 = vsel %vm302, %v339, %v343
        %v346 = vshrl.u32 %v257, 16
        %v348 = vrot.slane %v346, 4
        %v349 = vshll.u32 %v257, 16
        %v351 = vrot.slane %v349, 5
        %v352 = vor.u32 %v348, %v351
        %v353 = vrot.slane %v352, 4
        %v355 = vshll.u32 %v258, 16
        %v357 = vrot.slane %v355, 5
        %v358 = vsel %vm302, %v353, %v357
        %v360 = vshrl.u32 %v259, 16
        %v362 = vrot.slane %v360, 4
        %v363 = vshll.u32 %v259, 16
        %v365 = vrot.slane %v363, 5
        %v366 = vor.u32 %v362, %v365
        %v367 = vrot.slane %v366, 4
        %v369 = vshll.u32 %v260, 16
        %v371 = vrot.slane %v369, 5
        %v372 = vsel %vm302, %v367, %v371
        %v374 = vshrl.u32 %v261, 16
        %v376 = vrot.slane %v374, 4
        %v377 = vshll.u32 %v261, 16
        %v379 = vrot.slane %v377, 5
        %v380 = vor.u32 %v376, %v379
        %v381 = vrot.slane %v380, 4
        %v383 = vshll.u32 %v262, 16
        %v385 = vrot.slane %v383, 5
        %v386 = vsel %vm302, %v381, %v385
        %v388 = vshrl.u32 %v263, 16
        %v390 = vrot.slane %v388, 4
        %v391 = vshll.u32 %v263, 16
        %v393 = vrot.slane %v391, 5
        %v394 = vor.u32 %v390, %v393
        %v395 = vrot.slane %v394, 4
        %v397 = vshll.u32 %v264, 16
        %v399 = vrot.slane %v397, 5
        %v400 = vsel %vm302, %v395, %v399
        %v402 = vshrl.u32 %v265, 16
        %v404 = vrot.slane %v402, 4
        %v405 = vshll.u32 %v265, 16
        %v407 = vrot.slane %v405, 5
        %v408 = vor.u32 %v404, %v407
        %v409 = vrot.slane %v408, 4
        %v411 = vshll.u32 %v266, 16
        %v413 = vrot.slane %v411, 5
        %v414 = vsel %vm302, %v409, %v413
        %415 = vrot.lane.b32.xlu0 %v316, 127
        %v416 = vpop.permute.xlu0 %415
        %417 = vrot.lane.b32.xlu0 %v330, 127
        %v418 = vpop.permute.xlu0 %417
        %419 = vrot.lane.b32.xlu0 %v344, 127
        %v420 = vpop.permute.xlu0 %419
        %421 = vrot.lane.b32.xlu0 %v358, 127
        %v422 = vpop.permute.xlu0 %421
        %v423 = vpack.i.b16 %v253, %v251
        %v425 = vpack.i.b16 %v318, %v304
        %v427 = vpack.i.b16 %v257, %v255
        %v429 = vpack.i.b16 %v346, %v332
        %v431 = vpack.i.b16 %v261, %v259
        %v433 = vpack.i.b16 %v374, %v360
        %v435 = vpack.i.b16 %v265, %v263
        %v437 = vpack.i.b16 %v402, %v388
        %v441 = vpack.i.b16 %v283, %v281
        %v443 = vshrl.u32 %v281, 16
        %v444 = vshrl.u32 %v283, 16
        %v445 = vpack.i.b16 %v444, %v443
        %v449 = vpack.i.b16 %v287, %v285
        %v451 = vshrl.u32 %v285, 16
        %v452 = vshrl.u32 %v287, 16
        %v453 = vpack.i.b16 %v452, %v451
        %v457 = vpack.i.b16 %v268, %v267
        %v459 = vshrl.u32 %v267, 16
        %v460 = vshrl.u32 %v268, 16
        %v461 = vpack.i.b16 %v460, %v459
        %v465 = vpack.i.b16 %v270, %v269
        %v467 = vshrl.u32 %v269, 16
        %v468 = vshrl.u32 %v270, 16
        %v469 = vpack.i.b16 %v468, %v467
        %v473 = vpack.i.b16 %v272, %v271
        %v475 = vshrl.u32 %v271, 16
        %v476 = vshrl.u32 %v272, 16
        %v477 = vpack.i.b16 %v476, %v475
        %v481 = vpack.i.b16 %v274, %v273
        %v483 = vshrl.u32 %v273, 16
        %v484 = vshrl.u32 %v274, 16
        %v485 = vpack.i.b16 %v484, %v483
        %v489 = vpack.i.b16 %v295, %v293
        %v491 = vshrl.u32 %v293, 16
        %v492 = vshrl.u32 %v295, 16
        %v493 = vpack.i.b16 %v492, %v491
        %v497 = vpack.i.b16 %v299, %v297
        %v499 = vshrl.u32 %v297, 16
        %v500 = vshrl.u32 %v299, 16
        %v501 = vpack.i.b16 %v500, %v499
        %v505 = vpack.i.b16 %v330, %v316
        %v507 = vshrl.u32 %v316, 16
        %v508 = vshrl.u32 %v330, 16
        %v509 = vpack.i.b16 %v508, %v507
        %v513 = vpack.i.b16 %v358, %v344
        %v515 = vshrl.u32 %v344, 16
        %v516 = vshrl.u32 %v358, 16
        %v517 = vpack.i.b16 %v516, %v515
        %v521 = vpack.i.b16 %v386, %v372
        %v523 = vshrl.u32 %v372, 16
        %v524 = vshrl.u32 %v386, 16
        %v525 = vpack.i.b16 %v524, %v523
        %v529 = vpack.i.b16 %v414, %v400
        %v531 = vshrl.u32 %v400, 16
        %v532 = vshrl.u32 %v414, 16
        %v533 = vpack.i.b16 %v532, %v531
        %v537 = vpack.i.b16 %v418, %v416
        %v538 = vshrl.u32 %v416, 16
        %v539 = vshrl.u32 %v418, 16
        %v540 = vpack.i.b16 %v539, %v538
        %v543 = vpack.i.b16 %v422, %v420
        %v544 = vshrl.u32 %v420, 16
        %v545 = vshrl.u32 %v422, 16
        %v546 = vpack.i.b16 %v545, %v544
        %v547 = vcombine.low %v423, %v431
        %v549 = vunpack.c.l.s4 1983009808
        %v550 = vunpack.c.0.s8 %v549
        %v551 = vlaneseq
        %v552 = vshrl.u32 %v551, 7
        %v553 = vsub.s32 %v550, %v552
        %v554 = vrot.slane %v547, %v553
        %v555 = vcombine.low %v427, %v435
        %v557 = vunpack.c.l.s4 1983009808
        %v558 = vunpack.c.0.s8 %v557
        %v559 = vlaneseq
        %v560 = vshrl.u32 %v559, 7
        %v561 = vsub.s32 %v558, %v560
        %v562 = vrot.slane %v555, %v561
        %v563 = vcombine.low %v554, %v562
        %v564 = vcombine.high %v554, %v562
        %v566 = vunpack.c.l.s4 1934713408
        %v567 = vunpack.c.0.s8 %v566
        %v568 = vlaneseq
        %v569 = vshrl.u32 %v568, 7
        %v570 = vsub.s32 %v567, %v569
        %v571 = vrot.slane %v563, %v570
        %v573 = vunpack.c.l.s4 1934713408
        %v574 = vunpack.c.0.s8 %v573
        %v575 = vlaneseq
        %v576 = vshrl.u32 %v575, 7
        %v577 = vsub.s32 %v574, %v576
        %v578 = vrot.slane %v564, %v577
        %v579 = vcombine.high %v571, 0
        %v580 = vcombine.high %v578, 0
        %v581 = vcombine.low %v425, %v433
        %v583 = vunpack.c.l.s4 1983009808
        %v584 = vunpack.c.0.s8 %v583
        %v585 = vlaneseq
        %v586 = vshrl.u32 %v585, 7
        %v587 = vsub.s32 %v584, %v586
        %v588 = vrot.slane %v581, %v587
        %v589 = vcombine.low %v429, %v437
        %v591 = vunpack.c.l.s4 1983009808
        %v592 = vunpack.c.0.s8 %v591
        %v593 = vlaneseq
        %v594 = vshrl.u32 %v593, 7
        %v595 = vsub.s32 %v592, %v594
        %v596 = vrot.slane %v589, %v595
        %v597 = vcombine.low %v588, %v596
        %v598 = vcombine.high %v588, %v596
        %v600 = vunpack.c.l.s4 1934713408
        %v601 = vunpack.c.0.s8 %v600
        %v602 = vlaneseq
        %v603 = vshrl.u32 %v602, 7
        %v604 = vsub.s32 %v601, %v603
        %v605 = vrot.slane %v597, %v604
        %v607 = vunpack.c.l.s4 1934713408
        %v608 = vunpack.c.0.s8 %v607
        %v609 = vlaneseq
        %v610 = vshrl.u32 %v609, 7
        %v611 = vsub.s32 %v608, %v610
        %v612 = vrot.slane %v598, %v611
        %v613 = vcombine.high %v605, 0
        %v614 = vcombine.high %v612, 0
        %v615 = vcombine.low %v441, %v457
        %v617 = vunpack.c.l.s4 1983009808
        %v618 = vunpack.c.0.s8 %v617
        %v619 = vlaneseq
        %v620 = vshrl.u32 %v619, 7
        %v621 = vsub.s32 %v618, %v620
        %v622 = vrot.slane %v615, %v621
        %v623 = vcombine.low %v449, %v465
        %v625 = vunpack.c.l.s4 1983009808
        %v626 = vunpack.c.0.s8 %v625
        %v627 = vlaneseq
        %v628 = vshrl.u32 %v627, 7
        %v629 = vsub.s32 %v626, %v628
        %v630 = vrot.slane %v623, %v629
        %v631 = vcombine.low %v622, %v630
        %v632 = vcombine.high %v622, %v630
        %v634 = vunpack.c.l.s4 1934713408
        %v635 = vunpack.c.0.s8 %v634
        %v636 = vlaneseq
        %v637 = vshrl.u32 %v636, 7
        %v638 = vsub.s32 %v635, %v637
        %v639 = vrot.slane %v631, %v638
        %v641 = vunpack.c.l.s4 1934713408
        %v642 = vunpack.c.0.s8 %v641
        %v643 = vlaneseq
        %v644 = vshrl.u32 %v643, 7
        %v645 = vsub.s32 %v642, %v644
        %v646 = vrot.slane %v632, %v645
        %v647 = vcombine.high %v639, 0
        %v648 = vcombine.high %v646, 0
        %v649 = vcombine.low %v445, %v461
        %v651 = vunpack.c.l.s4 1983009808
        %v652 = vunpack.c.0.s8 %v651
        %v653 = vlaneseq
        %v654 = vshrl.u32 %v653, 7
        %v655 = vsub.s32 %v652, %v654
        %v656 = vrot.slane %v649, %v655
        %v657 = vcombine.low %v453, %v469
        %v659 = vunpack.c.l.s4 1983009808
        %v660 = vunpack.c.0.s8 %v659
        %v661 = vlaneseq
        %v662 = vshrl.u32 %v661, 7
        %v663 = vsub.s32 %v660, %v662
        %v664 = vrot.slane %v657, %v663
        %v665 = vcombine.low %v656, %v664
        %v666 = vcombine.high %v656, %v664
        %v668 = vunpack.c.l.s4 1934713408
        %v669 = vunpack.c.0.s8 %v668
        %v670 = vlaneseq
        %v671 = vshrl.u32 %v670, 7
        %v672 = vsub.s32 %v669, %v671
        %v673 = vrot.slane %v665, %v672
        %v675 = vunpack.c.l.s4 1934713408
        %v676 = vunpack.c.0.s8 %v675
        %v677 = vlaneseq
        %v678 = vshrl.u32 %v677, 7
        %v679 = vsub.s32 %v676, %v678
        %v680 = vrot.slane %v666, %v679
        %v681 = vcombine.high %v673, 0
        %v682 = vcombine.high %v680, 0
        %v683 = vcombine.low %v473, %v489
        %v685 = vunpack.c.l.s4 1983009808
        %v686 = vunpack.c.0.s8 %v685
        %v687 = vlaneseq
        %v688 = vshrl.u32 %v687, 7
        %v689 = vsub.s32 %v686, %v688
        %v690 = vrot.slane %v683, %v689
        %v691 = vcombine.low %v481, %v497
        %v693 = vunpack.c.l.s4 1983009808
        %v694 = vunpack.c.0.s8 %v693
        %v695 = vlaneseq
        %v696 = vshrl.u32 %v695, 7
        %v697 = vsub.s32 %v694, %v696
        %v698 = vrot.slane %v691, %v697
        %v699 = vcombine.low %v690, %v698
        %v700 = vcombine.high %v690, %v698
        %v702 = vunpack.c.l.s4 1934713408
        %v703 = vunpack.c.0.s8 %v702
        %v704 = vlaneseq
        %v705 = vshrl.u32 %v704, 7
        %v706 = vsub.s32 %v703, %v705
        %v707 = vrot.slane %v699, %v706
        %v709 = vunpack.c.l.s4 1934713408
        %v710 = vunpack.c.0.s8 %v709
        %v711 = vlaneseq
        %v712 = vshrl.u32 %v711, 7
        %v713 = vsub.s32 %v710, %v712
        %v714 = vrot.slane %v700, %v713
        %v715 = vcombine.high %v707, 0
        %v716 = vcombine.high %v714, 0
        %v717 = vcombine.low %v477, %v493
        %v719 = vunpack.c.l.s4 1983009808
        %v720 = vunpack.c.0.s8 %v719
        %v721 = vlaneseq
        %v722 = vshrl.u32 %v721, 7
        %v723 = vsub.s32 %v720, %v722
        %v724 = vrot.slane %v717, %v723
        %v725 = vcombine.low %v485, %v501
        %v727 = vunpack.c.l.s4 1983009808
        %v728 = vunpack.c.0.s8 %v727
        %v729 = vlaneseq
        %v730 = vshrl.u32 %v729, 7
        %v731 = vsub.s32 %v728, %v730
        %v732 = vrot.slane %v725, %v731
        %v733 = vcombine.low %v724, %v732
        %v734 = vcombine.high %v724, %v732
        %v736 = vunpack.c.l.s4 1934713408
        %v737 = vunpack.c.0.s8 %v736
        %v738 = vlaneseq
        %v739 = vshrl.u32 %v738, 7
        %v740 = vsub.s32 %v737, %v739
        %v741 = vrot.slane %v733, %v740
        %v743 = vunpack.c.l.s4 1934713408
        %v744 = vunpack.c.0.s8 %v743
        %v745 = vlaneseq
        %v746 = vshrl.u32 %v745, 7
        %v747 = vsub.s32 %v744, %v746
        %v748 = vrot.slane %v734, %v747
        %v749 = vcombine.high %v741, 0
        %v750 = vcombine.high %v748, 0
        %v751 = vcombine.low %v505, %v521
        %v753 = vunpack.c.l.s4 1983009808
        %v754 = vunpack.c.0.s8 %v753
        %v755 = vlaneseq
        %v756 = vshrl.u32 %v755, 7
        %v757 = vsub.s32 %v754, %v756
        %v758 = vrot.slane %v751, %v757
        %v759 = vcombine.low %v513, %v529
        %v761 = vunpack.c.l.s4 1983009808
        %v762 = vunpack.c.0.s8 %v761
        %v763 = vlaneseq
        %v764 = vshrl.u32 %v763, 7
        %v765 = vsub.s32 %v762, %v764
        %v766 = vrot.slane %v759, %v765
        %v767 = vcombine.low %v758, %v766
        %v768 = vcombine.high %v758, %v766
        %v770 = vunpack.c.l.s4 1934713408
        %v771 = vunpack.c.0.s8 %v770
        %v772 = vlaneseq
        %v773 = vshrl.u32 %v772, 7
        %v774 = vsub.s32 %v771, %v773
        %v775 = vrot.slane %v767, %v774
        %v777 = vunpack.c.l.s4 1934713408
        %v778 = vunpack.c.0.s8 %v777
        %v779 = vlaneseq
        %v780 = vshrl.u32 %v779, 7
        %v781 = vsub.s32 %v778, %v780
        %v782 = vrot.slane %v768, %v781
        %v783 = vcombine.high %v775, 0
        %v784 = vcombine.high %v782, 0
        %v785 = vcombine.low %v509, %v525
        %v787 = vunpack.c.l.s4 1983009808
        %v788 = vunpack.c.0.s8 %v787
        %v789 = vlaneseq
        %v790 = vshrl.u32 %v789, 7
        %v791 = vsub.s32 %v788, %v790
        %v792 = vrot.slane %v785, %v791
        %v793 = vcombine.low %v517, %v533
        %v795 = vunpack.c.l.s4 1983009808
        %v796 = vunpack.c.0.s8 %v795
        %v797 = vlaneseq
        %v798 = vshrl.u32 %v797, 7
        %v799 = vsub.s32 %v796, %v798
        %v800 = vrot.slane %v793, %v799
        %v801 = vcombine.low %v792, %v800
        %v802 = vcombine.high %v792, %v800
        %v804 = vunpack.c.l.s4 1934713408
        %v805 = vunpack.c.0.s8 %v804
        %v806 = vlaneseq
        %v807 = vshrl.u32 %v806, 7
        %v808 = vsub.s32 %v805, %v807
        %v809 = vrot.slane %v801, %v808
        %v811 = vunpack.c.l.s4 1934713408
        %v812 = vunpack.c.0.s8 %v811
        %v813 = vlaneseq
        %v814 = vshrl.u32 %v813, 7
        %v815 = vsub.s32 %v812, %v814
        %v816 = vrot.slane %v802, %v815
        %v817 = vcombine.high %v809, 0
        %v818 = vcombine.high %v816, 0
        %v821 = vunpack.c.l.s4 1983009808
        %v822 = vunpack.c.0.s8 %v821
        %v823 = vlaneseq
        %v824 = vshrl.u32 %v823, 7
        %v825 = vsub.s32 %v822, %v824
        %v826 = vrot.slane %v537, %v825
        %v829 = vunpack.c.l.s4 1983009808
        %v830 = vunpack.c.0.s8 %v829
        %v831 = vlaneseq
        %v832 = vshrl.u32 %v831, 7
        %v833 = vsub.s32 %v830, %v832
        %v834 = vrot.slane %v543, %v833
        %v835 = vcombine.low %v826, %v834
        %v836 = vcombine.high %v826, %v834
        %v838 = vunpack.c.l.s4 1934713408
        %v839 = vunpack.c.0.s8 %v838
        %v840 = vlaneseq
        %v841 = vshrl.u32 %v840, 7
        %v842 = vsub.s32 %v839, %v841
        %v843 = vrot.slane %v835, %v842
        %v845 = vunpack.c.l.s4 1934713408
        %v846 = vunpack.c.0.s8 %v845
        %v847 = vlaneseq
        %v848 = vshrl.u32 %v847, 7
        %v849 = vsub.s32 %v846, %v848
        %v850 = vrot.slane %v836, %v849
        %v851 = vcombine.high %v843, 0
        %v852 = vcombine.high %v850, 0
        %v855 = vunpack.c.l.s4 1983009808
        %v856 = vunpack.c.0.s8 %v855
        %v857 = vlaneseq
        %v858 = vshrl.u32 %v857, 7
        %v859 = vsub.s32 %v856, %v858
        %v860 = vrot.slane %v540, %v859
        %v863 = vunpack.c.l.s4 1983009808
        %v864 = vunpack.c.0.s8 %v863
        %v865 = vlaneseq
        %v866 = vshrl.u32 %v865, 7
        %v867 = vsub.s32 %v864, %v866
        %v868 = vrot.slane %v546, %v867
        %v869 = vcombine.low %v860, %v868
        %v870 = vcombine.high %v860, %v868
        %v872 = vunpack.c.l.s4 1934713408
        %v873 = vunpack.c.0.s8 %v872
        %v874 = vlaneseq
        %v875 = vshrl.u32 %v874, 7
        %v876 = vsub.s32 %v873, %v875
        %v877 = vrot.slane %v869, %v876
        %v879 = vunpack.c.l.s4 1934713408
        %v880 = vunpack.c.0.s8 %v879
        %v881 = vlaneseq
        %v882 = vshrl.u32 %v881, 7
        %v883 = vsub.s32 %v880, %v882
        %v884 = vrot.slane %v870, %v883
        %v885 = vcombine.high %v877, 0
        %v886 = vcombine.high %v884, 0
        %v892 = vunpack.c.l.b16 %v571
        %v893 = vunpack.c.l.b16 %v639
        %v894 = vunpack.c.l.b16 %v707
        %v895 = vunpack.c.l.b16 %v775
        %v896 = vunpack.c.l.b16 %v843
        %v897 = vpack.c.b16 %v893, %v892
        %v898 = vpack.c.b16 %v895, %v894
        %v899 = vpack.c.b16 %v896, %v896
        %v905 = vunpack.c.l.b16 %v605
        %v906 = vunpack.c.l.b16 %v673
        %v907 = vunpack.c.l.b16 %v741
        %v908 = vunpack.c.l.b16 %v809
        %v909 = vunpack.c.l.b16 %v877
        %v910 = vpack.c.b16 %v906, %v905
        %v911 = vpack.c.b16 %v908, %v907
        %v912 = vpack.c.b16 %v909, %v909
        %913 = vrot.lane.b32.xlu0 %v910, 8
        %v914 = vpop.permute.xlu0 %913
        %915 = vrot.lane.b32.xlu0 %v911, 8
        %v916 = vpop.permute.xlu0 %915
        %917 = vrot.lane.b32.xlu0 %v912, 8
        %v918 = vpop.permute.xlu0 %917
        %v924 = vunpack.c.l.b16 %v579
        %v925 = vunpack.c.l.b16 %v647
        %v926 = vunpack.c.l.b16 %v715
        %v927 = vunpack.c.l.b16 %v783
        %v928 = vunpack.c.l.b16 %v851
        %v929 = vpack.c.b16 %v925, %v924
        %v930 = vpack.c.b16 %v927, %v926
        %v931 = vpack.c.b16 %v928, %v928
        %932 = vrot.lane.b32.xlu0 %v929, 16
        %v933 = vpop.permute.xlu0 %932
        %934 = vrot.lane.b32.xlu0 %v930, 16
        %v935 = vpop.permute.xlu0 %934
        %936 = vrot.lane.b32.xlu0 %v931, 16
        %v937 = vpop.permute.xlu0 %936
        %v943 = vunpack.c.l.b16 %v613
        %v944 = vunpack.c.l.b16 %v681
        %v945 = vunpack.c.l.b16 %v749
        %v946 = vunpack.c.l.b16 %v817
        %v947 = vunpack.c.l.b16 %v885
        %v948 = vpack.c.b16 %v944, %v943
        %v949 = vpack.c.b16 %v946, %v945
        %v950 = vpack.c.b16 %v947, %v947
        %951 = vrot.lane.b32.xlu0 %v948, 24
        %v952 = vpop.permute.xlu0 %951
        %953 = vrot.lane.b32.xlu0 %v949, 24
        %v954 = vpop.permute.xlu0 %953
        %955 = vrot.lane.b32.xlu0 %v950, 24
        %v956 = vpop.permute.xlu0 %955
        %v962 = vunpack.c.l.b16 %v578
        %v963 = vunpack.c.l.b16 %v646
        %v964 = vunpack.c.l.b16 %v714
        %v965 = vunpack.c.l.b16 %v782
        %v966 = vunpack.c.l.b16 %v850
        %v967 = vpack.c.b16 %v963, %v962
        %v968 = vpack.c.b16 %v965, %v964
        %v969 = vpack.c.b16 %v966, %v966
        %970 = vrot.lane.b32.xlu0 %v967, 32
        %v971 = vpop.permute.xlu0 %970
        %972 = vrot.lane.b32.xlu0 %v968, 32
        %v973 = vpop.permute.xlu0 %972
        %974 = vrot.lane.b32.xlu0 %v969, 32
        %v975 = vpop.permute.xlu0 %974
        %v981 = vunpack.c.l.b16 %v612
        %v982 = vunpack.c.l.b16 %v680
        %v983 = vunpack.c.l.b16 %v748
        %v984 = vunpack.c.l.b16 %v816
        %v985 = vunpack.c.l.b16 %v884
        %v986 = vpack.c.b16 %v982, %v981
        %v987 = vpack.c.b16 %v984, %v983
        %v988 = vpack.c.b16 %v985, %v985
        %989 = vrot.lane.b32.xlu0 %v986, 40
        %v990 = vpop.permute.xlu0 %989
        %991 = vrot.lane.b32.xlu0 %v987, 40
        %v992 = vpop.permute.xlu0 %991
        %993 = vrot.lane.b32.xlu0 %v988, 40
        %v994 = vpop.permute.xlu0 %993
        %v1000 = vunpack.c.l.b16 %v580
        %v1001 = vunpack.c.l.b16 %v648
        %v1002 = vunpack.c.l.b16 %v716
        %v1003 = vunpack.c.l.b16 %v784
        %v1004 = vunpack.c.l.b16 %v852
        %v1005 = vpack.c.b16 %v1001, %v1000
        %v1006 = vpack.c.b16 %v1003, %v1002
        %v1007 = vpack.c.b16 %v1004, %v1004
        %1008 = vrot.lane.b32.xlu0 %v1005, 48
        %v1009 = vpop.permute.xlu0 %1008
        %1010 = vrot.lane.b32.xlu0 %v1006, 48
        %v1011 = vpop.permute.xlu0 %1010
        %1012 = vrot.lane.b32.xlu0 %v1007, 48
        %v1013 = vpop.permute.xlu0 %1012
        %v1019 = vunpack.c.l.b16 %v614
        %v1020 = vunpack.c.l.b16 %v682
        %v1021 = vunpack.c.l.b16 %v750
        %v1022 = vunpack.c.l.b16 %v818
        %v1023 = vunpack.c.l.b16 %v886
        %v1024 = vpack.c.b16 %v1020, %v1019
        %v1025 = vpack.c.b16 %v1022, %v1021
        %v1026 = vpack.c.b16 %v1023, %v1023
        %1027 = vrot.lane.b32.xlu0 %v1024, 56
        %v1028 = vpop.permute.xlu0 %1027
        %1029 = vrot.lane.b32.xlu0 %v1025, 56
        %v1030 = vpop.permute.xlu0 %1029
        %1031 = vrot.lane.b32.xlu0 %v1026, 56
        %v1032 = vpop.permute.xlu0 %1031
        %vm1033 = vcmask 64512
        %v1036 = vsel %vm1033, %v897, %v914
        %v1039 = vsel %vm1033, %v898, %v916
        %v1042 = vsel %vm1033, %v899, %v918
        %vm1043 = vcmask 130048
        %v1045 = vsel %vm1043, %v1036, %v933
        %v1047 = vsel %vm1043, %v1039, %v935
        %v1049 = vsel %vm1043, %v1042, %v937
        %vm1050 = vcmask 195584
        %v1052 = vsel %vm1050, %v1045, %v952
        %v1054 = vsel %vm1050, %v1047, %v954
        %v1056 = vsel %vm1050, %v1049, %v956
        %vm1057 = vcmask 261120
        %v1059 = vsel %vm1057, %v1052, %v971
        %v1061 = vsel %vm1057, %v1054, %v973
        %v1063 = vsel %vm1057, %v1056, %v975
        %vm1064 = vcmask 326656
        %v1066 = vsel %vm1064, %v1059, %v990
        %v1068 = vsel %vm1064, %v1061, %v992
        %v1070 = vsel %vm1064, %v1063, %v994
        %vm1071 = vcmask 392192
        %v1073 = vsel %vm1071, %v1066, %v1009
        %v1075 = vsel %vm1071, %v1068, %v1011
        %v1077 = vsel %vm1071, %v1070, %v1013
        %vm1078 = vcmask 457728
        %v1080 = vsel %vm1078, %v1073, %v1028
        %v1083 = vsel %vm1078, %v1075, %v1030
        %v1086 = vsel %vm1078, %v1077, %v1032
        %v1087 = vld [vmem:[%s1] sm:$0xf]
        %vm1088 = vcmask 293888
        %v1090 = vsel %vm1088, %v1087, 0
        %vm1092 = vcmask 1041408
        %v1093 = vsel %vm1092, %v1086, 0
        %1095 = vmatprep.subr.bf16.mxu0 0
        %1096 = vmatpush1.bf16.msra.mxu0 %v1080
        %1097 = vmatprep.subr.bf16.mxu0 0
        %1098 = vmatpush1.bf16.msra.mxu0 %v1083
        %1099 = vmatprep.subr.bf16.mxu0 0
        %1100 = vmatpush1.bf16.msra.mxu0 %v1093
        %1101 = vmatprep.subr.bf16.mxu0 0
        %1102 = vmatpush1.bf16.msra.mxu0 0
        %1103 = vmatprep.subr.bf16.mxu0 0
        %1104 = vmatpush1.bf16.msra.mxu0 0
        %1105 = vmatprep.subr.bf16.mxu0 0
        %1106 = vmatpush1.bf16.msra.mxu0 0
        %1107 = vmatprep.subr.bf16.mxu0 0
        %1108 = vmatpush1.bf16.msra.mxu0 0
        %1109 = vmatprep.subr.bf16.mxu0 0
        %1110 = vmatpush1.bf16.msra.mxu0 0
        %1111 = vmatprep.subr.bf16.mxu0 0
        %1112 = vmatpush1.bf16.msra.mxu0 0
        %1113 = vmatprep.subr.bf16.mxu0 0
        %1114 = vmatpush1.bf16.msra.mxu0 0
        %1115 = vmatprep.subr.bf16.mxu0 0
        %1116 = vmatpush1.bf16.msra.mxu0 0
        %1117 = vmatprep.subr.bf16.mxu0 0
        %1118 = vmatpush1.bf16.msra.mxu0 0
        %1119 = vmatprep.subr.bf16.mxu0 0
        %1120 = vmatpush1.bf16.msra.mxu0 0
        %1121 = vmatprep.subr.bf16.mxu0 0
        %1122 = vmatpush1.bf16.msra.mxu0 0
        %1123 = vmatprep.subr.bf16.mxu0 0
        %1124 = vmatpush1.bf16.msra.mxu0 0
        %1125 = vmatprep.subr.bf16.mxu0 0
        %1126 = vmatpush1.bf16.msra.mxu0 0
        %1127 = vmatprep.mubr.bf16.mxu0 0
        %1128 = vmatmul.mubr.bf16.gmra.mrb[0].mxu0 %v1090
        %v1129 = vpop.f32.mrb[0].mxu0
        %v1130 = vadd.f32 0.0, %v1129
        %v1131 = vpop.f32.mrb[0].mxu0
        %v1132 = vpop.f32.mrb[0].mxu0
        %v1133 = vpop.f32.mrb[0].mxu0
        %1134 = vdwg.mxu0
        %1136 = vset.pattern.permute.xlu0 0
        %1137 = vperm.xlu0 %1136, %v275
        %v1138 = vpop.permute.xlu0 %1137
        %v1140 = vmul.f32 %v1130, %v1138
        %1141 = vset.pattern.permute.xlu0 1
        %1142 = vperm.xlu0 %1141, %v275
        %v1143 = vpop.permute.xlu0 %1142
        %v1145 = vadd.f32 %v1140, %v1143
        %v1146 = vmax.f32 %v1145, 0.0
        %v1147 = vpack.c.bf16 %v1146, %v1146
        %1149 = vrot.lane.b32.xlu0 %v1147, 120
        %v1150 = vpop.permute.xlu0 %1149
        %1152 = vrot.lane.b32.xlu0 %v1147, 112
        %v1153 = vpop.permute.xlu0 %1152
        %1155 = vrot.lane.b32.xlu0 %v1147, 104
        %v1156 = vpop.permute.xlu0 %1155
        %1158 = vrot.lane.b32.xlu0 %v1147, 96
        %v1159 = vpop.permute.xlu0 %1158
        %1161 = vrot.lane.b32.xlu0 %v1147, 88
        %v1162 = vpop.permute.xlu0 %1161
        %1164 = vrot.lane.b32.xlu0 %v1147, 80
        %v1165 = vpop.permute.xlu0 %1164
        %1167 = vrot.lane.b32.xlu0 %v1147, 72
        %v1168 = vpop.permute.xlu0 %1167
        %v1170 = vcombine.low %v1147, %v1159
        %v1172 = vunpack.c.l.s4 1983009808
        %v1173 = vunpack.c.0.s8 %v1172
        %v1174 = vlaneseq
        %v1175 = vshrl.u32 %v1174, 7
        %v1176 = vsub.s32 %v1173, %v1175
        %v1177 = vrot.slane %v1170, %v1176
        %v1178 = vcombine.low %v1153, %v1165
        %v1180 = vunpack.c.l.s4 1983009808
        %v1181 = vunpack.c.0.s8 %v1180
        %v1182 = vlaneseq
        %v1183 = vshrl.u32 %v1182, 7
        %v1184 = vsub.s32 %v1181, %v1183
        %v1185 = vrot.slane %v1178, %v1184
        %v1186 = vcombine.low %v1177, %v1185
        %v1187 = vcombine.high %v1177, %v1185
        %v1189 = vunpack.c.l.s4 1934713408
        %v1190 = vunpack.c.0.s8 %v1189
        %v1191 = vlaneseq
        %v1192 = vshrl.u32 %v1191, 7
        %v1193 = vsub.s32 %v1190, %v1192
        %v1194 = vrot.slane %v1186, %v1193
        %v1196 = vunpack.c.l.s4 1934713408
        %v1197 = vunpack.c.0.s8 %v1196
        %v1198 = vlaneseq
        %v1199 = vshrl.u32 %v1198, 7
        %v1200 = vsub.s32 %v1197, %v1199
        %v1201 = vrot.slane %v1187, %v1200
        %v1202 = vcombine.high %v1194, 0
        %v1203 = vcombine.high %v1201, 0
        %v1204 = vcombine.low %v1150, %v1162
        %v1206 = vunpack.c.l.s4 1983009808
        %v1207 = vunpack.c.0.s8 %v1206
        %v1208 = vlaneseq
        %v1209 = vshrl.u32 %v1208, 7
        %v1210 = vsub.s32 %v1207, %v1209
        %v1211 = vrot.slane %v1204, %v1210
        %v1212 = vcombine.low %v1156, %v1168
        %v1214 = vunpack.c.l.s4 1983009808
        %v1215 = vunpack.c.0.s8 %v1214
        %v1216 = vlaneseq
        %v1217 = vshrl.u32 %v1216, 7
        %v1218 = vsub.s32 %v1215, %v1217
        %v1219 = vrot.slane %v1212, %v1218
        %v1220 = vcombine.low %v1211, %v1219
        %v1221 = vcombine.high %v1211, %v1219
        %v1223 = vunpack.c.l.s4 1934713408
        %v1224 = vunpack.c.0.s8 %v1223
        %v1225 = vlaneseq
        %v1226 = vshrl.u32 %v1225, 7
        %v1227 = vsub.s32 %v1224, %v1226
        %v1228 = vrot.slane %v1220, %v1227
        %v1230 = vunpack.c.l.s4 1934713408
        %v1231 = vunpack.c.0.s8 %v1230
        %v1232 = vlaneseq
        %v1233 = vshrl.u32 %v1232, 7
        %v1234 = vsub.s32 %v1231, %v1233
        %v1235 = vrot.slane %v1221, %v1234
        %v1236 = vcombine.high %v1228, 0
        %v1237 = vcombine.high %v1235, 0
        %v1240 = vpack.i.b16 %v1228, %v1194
        %v1241 = vshrl.u32 %v1194, 16
        %v1242 = vshrl.u32 %v1228, 16
        %v1243 = vpack.i.b16 %v1242, %v1241
        %v1246 = vpack.i.b16 %v1236, %v1202
        %v1247 = vshrl.u32 %v1202, 16
        %v1248 = vshrl.u32 %v1236, 16
        %v1249 = vpack.i.b16 %v1248, %v1247
        %v1252 = vpack.i.b16 %v1235, %v1201
        %v1253 = vshrl.u32 %v1201, 16
        %v1254 = vshrl.u32 %v1235, 16
        %v1255 = vpack.i.b16 %v1254, %v1253
        %v1258 = vpack.i.b16 %v1237, %v1203
        %v1259 = vshrl.u32 %v1203, 16
        %v1260 = vshrl.u32 %v1237, 16
        %v1261 = vpack.i.b16 %v1260, %v1259
        %v1263 = vshrl.u32 %v1240, 16
        %v1265 = vrot.slane %v1263, 7
        %v1266 = vshll.u32 %v1240, 16
        %v1268 = vor.u32 %v1265, %v1266
        %v1270 = vshrl.u32 %v1243, 16
        %v1272 = vrot.slane %v1270, 7
        %v1273 = vshll.u32 %v1243, 16
        %v1275 = vor.u32 %v1272, %v1273
        %v1277 = vshrl.u32 %v1246, 16
        %v1279 = vrot.slane %v1277, 7
        %v1280 = vshll.u32 %v1246, 16
        %v1282 = vor.u32 %v1279, %v1280
        %v1284 = vshrl.u32 %v1249, 16
        %v1286 = vrot.slane %v1284, 7
        %v1287 = vshll.u32 %v1249, 16
        %v1289 = vor.u32 %v1286, %v1287
        %v1291 = vshrl.u32 %v1252, 16
        %v1293 = vrot.slane %v1291, 7
        %v1294 = vshll.u32 %v1252, 16
        %v1296 = vor.u32 %v1293, %v1294
        %v1298 = vshrl.u32 %v1255, 16
        %v1300 = vrot.slane %v1298, 7
        %v1301 = vshll.u32 %v1255, 16
        %v1303 = vor.u32 %v1300, %v1301
        %v1305 = vshrl.u32 %v1258, 16
        %v1307 = vrot.slane %v1305, 7
        %v1308 = vshll.u32 %v1258, 16
        %v1310 = vor.u32 %v1307, %v1308
        %v1312 = vshrl.u32 %v1261, 16
        %v1314 = vrot.slane %v1312, 7
        %v1315 = vshll.u32 %v1261, 16
        %v1317 = vor.u32 %v1314, %v1315
        %vm1326 = vcmask 1040384
        %vm1327 = vsmask.f32 256
        %vm1328 = vmand %vm1326, %vm1327
        %v1329 = vsel %vm1328, 0, %v1268
        %v1330 = vsel %vm1328, 0, %v1275
        %v1331 = vsel %vm1328, 0, %v1282
        %v1332 = vsel %vm1328, 0, %v1289
        %v1333 = vsel %vm1328, 0, %v1296
        %v1334 = vsel %vm1328, 0, %v1303
        %v1335 = vsel %vm1328, 0, %v1310
        %v1336 = vsel %vm1328, 0, %v1317
        %vm1337 = vcmask 1044480
        %vm1338 = vsmask.f32 4352
        %vm1339 = vmand %vm1337, %vm1338
        %v1340 = vsel %vm1339, %v1329, 0
        %v1341 = vsel %vm1339, %v1330, 0
        %v1342 = vsel %vm1339, %v1331, 0
        %v1343 = vsel %vm1339, %v1332, 0
        %v1344 = vsel %vm1339, %v1333, 0
        %v1345 = vsel %vm1339, %v1334, 0
        %v1346 = vsel %vm1339, %v1335, 0
        %v1347 = vsel %vm1339, %v1336, 0
        %1356 = vrot.lane.b32.xlu0 %v1340, 1
        %v1357 = vpop.permute.xlu0 %1356
        %1358 = vrot.lane.b32.xlu0 %v1341, 1
        %v1359 = vpop.permute.xlu0 %1358
        %1360 = vrot.lane.b32.xlu0 %v1342, 1
        %v1361 = vpop.permute.xlu0 %1360
        %1362 = vrot.lane.b32.xlu0 %v1343, 1
        %v1363 = vpop.permute.xlu0 %1362
        %1364 = vrot.lane.b32.xlu0 %v1344, 1
        %v1365 = vpop.permute.xlu0 %1364
        %1366 = vrot.lane.b32.xlu0 %v1345, 1
        %v1367 = vpop.permute.xlu0 %1366
        %1368 = vrot.lane.b32.xlu0 %v1346, 1
        %v1369 = vpop.permute.xlu0 %1368
        %1370 = vrot.lane.b32.xlu0 %v1347, 1
        %v1371 = vpop.permute.xlu0 %1370
        %vm1372 = vcmask 7168
        %v1375 = vsel %vm1372, 0, %v1357
        %v1377 = vsel %vm1372, 0, %v1359
        %v1379 = vsel %vm1372, 0, %v1361
        %v1381 = vsel %vm1372, 0, %v1363
        %v1383 = vsel %vm1372, 0, %v1365
        %v1385 = vsel %vm1372, 0, %v1367
        %v1387 = vsel %vm1372, 0, %v1369
        %v1389 = vsel %vm1372, 0, %v1371
        %vm1390 = vcmask 72704
        %v1391 = vsel %vm1390, %v1375, 0
        %v1393 = vsel %vm1390, %v1377, 0
        %v1395 = vsel %vm1390, %v1379, 0
        %v1397 = vsel %vm1390, %v1381, 0
        %v1399 = vsel %vm1390, %v1383, 0
        %v1401 = vsel %vm1390, %v1385, 0
        %v1403 = vsel %vm1390, %v1387, 0
        %v1405 = vsel %vm1390, %v1389, 0
        %1415 = vrot.lane.b32.xlu0 %v1391, 127
        %v1416 = vpop.permute.xlu0 %1415
        %1417 = vrot.lane.b32.xlu0 %v1393, 127
        %v1418 = vpop.permute.xlu0 %1417
        %1419 = vrot.lane.b32.xlu0 %v1395, 127
        %v1420 = vpop.permute.xlu0 %1419
        %1421 = vrot.lane.b32.xlu0 %v1397, 127
        %v1422 = vpop.permute.xlu0 %1421
        %1423 = vrot.lane.b32.xlu0 %v1399, 127
        %v1424 = vpop.permute.xlu0 %1423
        %1425 = vrot.lane.b32.xlu0 %v1401, 127
        %v1426 = vpop.permute.xlu0 %1425
        %1427 = vrot.lane.b32.xlu0 %v1403, 127
        %v1428 = vpop.permute.xlu0 %1427
        %1429 = vrot.lane.b32.xlu0 %v1405, 127
        %v1430 = vpop.permute.xlu0 %1429
        %1439 = vrot.lane.b32.xlu0 %v1391, 126
        %v1440 = vpop.permute.xlu0 %1439
        %1441 = vrot.lane.b32.xlu0 %v1393, 126
        %v1442 = vpop.permute.xlu0 %1441
        %1443 = vrot.lane.b32.xlu0 %v1395, 126
        %v1444 = vpop.permute.xlu0 %1443
        %1445 = vrot.lane.b32.xlu0 %v1397, 126
        %v1446 = vpop.permute.xlu0 %1445
        %1447 = vrot.lane.b32.xlu0 %v1399, 126
        %v1448 = vpop.permute.xlu0 %1447
        %1449 = vrot.lane.b32.xlu0 %v1401, 126
        %v1450 = vpop.permute.xlu0 %1449
        %1451 = vrot.lane.b32.xlu0 %v1403, 126
        %v1452 = vpop.permute.xlu0 %1451
        %1453 = vrot.lane.b32.xlu0 %v1405, 126
        %v1454 = vpop.permute.xlu0 %1453
        %v1463 = vshrl.u32 %v1391, 16
        %v1465 = vshll.u32 %v1391, 16
        %v1467 = vrot.slane %v1465, 1
        %v1468 = vor.u32 %v1463, %v1467
        %v1469 = vshrl.u32 %v1393, 16
        %v1471 = vshll.u32 %v1393, 16
        %v1473 = vrot.slane %v1471, 1
        %v1474 = vor.u32 %v1469, %v1473
        %v1475 = vshrl.u32 %v1395, 16
        %v1477 = vshll.u32 %v1395, 16
        %v1479 = vrot.slane %v1477, 1
        %v1480 = vor.u32 %v1475, %v1479
        %v1481 = vshrl.u32 %v1397, 16
        %v1483 = vshll.u32 %v1397, 16
        %v1485 = vrot.slane %v1483, 1
        %v1486 = vor.u32 %v1481, %v1485
        %v1487 = vshrl.u32 %v1399, 16
        %v1489 = vshll.u32 %v1399, 16
        %v1491 = vrot.slane %v1489, 1
        %v1492 = vor.u32 %v1487, %v1491
        %v1493 = vshrl.u32 %v1401, 16
        %v1495 = vshll.u32 %v1401, 16
        %v1497 = vrot.slane %v1495, 1
        %v1498 = vor.u32 %v1493, %v1497
        %v1499 = vshrl.u32 %v1403, 16
        %v1501 = vshll.u32 %v1403, 16
        %v1503 = vrot.slane %v1501, 1
        %v1504 = vor.u32 %v1499, %v1503
        %v1505 = vshrl.u32 %v1405, 16
        %v1507 = vshll.u32 %v1405, 16
        %v1509 = vrot.slane %v1507, 1
        %v1510 = vor.u32 %v1505, %v1509
        %1519 = vrot.lane.b32.xlu0 %v1468, 127
        %v1520 = vpop.permute.xlu0 %1519
        %1521 = vrot.lane.b32.xlu0 %v1474, 127
        %v1522 = vpop.permute.xlu0 %1521
        %1523 = vrot.lane.b32.xlu0 %v1480, 127
        %v1524 = vpop.permute.xlu0 %1523
        %1525 = vrot.lane.b32.xlu0 %v1486, 127
        %v1526 = vpop.permute.xlu0 %1525
        %1527 = vrot.lane.b32.xlu0 %v1492, 127
        %v1528 = vpop.permute.xlu0 %1527
        %1529 = vrot.lane.b32.xlu0 %v1498, 127
        %v1530 = vpop.permute.xlu0 %1529
        %1531 = vrot.lane.b32.xlu0 %v1504, 127
        %v1532 = vpop.permute.xlu0 %1531
        %1533 = vrot.lane.b32.xlu0 %v1510, 127
        %v1534 = vpop.permute.xlu0 %1533
        %1543 = vrot.lane.b32.xlu0 %v1468, 126
        %v1544 = vpop.permute.xlu0 %1543
        %1545 = vrot.lane.b32.xlu0 %v1474, 126
        %v1546 = vpop.permute.xlu0 %1545
        %1547 = vrot.lane.b32.xlu0 %v1480, 126
        %v1548 = vpop.permute.xlu0 %1547
        %1549 = vrot.lane.b32.xlu0 %v1486, 126
        %v1550 = vpop.permute.xlu0 %1549
        %1551 = vrot.lane.b32.xlu0 %v1492, 126
        %v1552 = vpop.permute.xlu0 %1551
        %1553 = vrot.lane.b32.xlu0 %v1498, 126
        %v1554 = vpop.permute.xlu0 %1553
        %1555 = vrot.lane.b32.xlu0 %v1504, 126
        %v1556 = vpop.permute.xlu0 %1555
        %1557 = vrot.lane.b32.xlu0 %v1510, 126
        %v1558 = vpop.permute.xlu0 %1557
        %v1567 = vrot.slane %v1391, 1
        %v1568 = vrot.slane %v1393, 1
        %v1569 = vrot.slane %v1395, 1
        %v1570 = vrot.slane %v1397, 1
        %v1571 = vrot.slane %v1399, 1
        %v1572 = vrot.slane %v1401, 1
        %v1573 = vrot.slane %v1403, 1
        %v1574 = vrot.slane %v1405, 1
        %1583 = vrot.lane.b32.xlu0 %v1567, 127
        %v1584 = vpop.permute.xlu0 %1583
        %1585 = vrot.lane.b32.xlu0 %v1568, 127
        %v1586 = vpop.permute.xlu0 %1585
        %1587 = vrot.lane.b32.xlu0 %v1569, 127
        %v1588 = vpop.permute.xlu0 %1587
        %1589 = vrot.lane.b32.xlu0 %v1570, 127
        %v1590 = vpop.permute.xlu0 %1589
        %1591 = vrot.lane.b32.xlu0 %v1571, 127
        %v1592 = vpop.permute.xlu0 %1591
        %1593 = vrot.lane.b32.xlu0 %v1572, 127
        %v1594 = vpop.permute.xlu0 %1593
        %1595 = vrot.lane.b32.xlu0 %v1573, 127
        %v1596 = vpop.permute.xlu0 %1595
        %1597 = vrot.lane.b32.xlu0 %v1574, 127
        %v1598 = vpop.permute.xlu0 %1597
        %1607 = vrot.lane.b32.xlu0 %v1567, 126
        %v1608 = vpop.permute.xlu0 %1607
        %1609 = vrot.lane.b32.xlu0 %v1568, 126
        %v1610 = vpop.permute.xlu0 %1609
        %1611 = vrot.lane.b32.xlu0 %v1569, 126
        %v1612 = vpop.permute.xlu0 %1611
        %1613 = vrot.lane.b32.xlu0 %v1570, 126
        %v1614 = vpop.permute.xlu0 %1613
        %1615 = vrot.lane.b32.xlu0 %v1571, 126
        %v1616 = vpop.permute.xlu0 %1615
        %1617 = vrot.lane.b32.xlu0 %v1572, 126
        %v1618 = vpop.permute.xlu0 %1617
        %1619 = vrot.lane.b32.xlu0 %v1573, 126
        %v1620 = vpop.permute.xlu0 %1619
        %1621 = vrot.lane.b32.xlu0 %v1574, 126
        %v1622 = vpop.permute.xlu0 %1621
        %v1631 = vcombine.low %v1391, %v1399
        %v1633 = vunpack.c.l.s4 1983009808
        %v1634 = vunpack.c.0.s8 %v1633
        %v1635 = vlaneseq
        %v1636 = vshrl.u32 %v1635, 7
        %v1637 = vsub.s32 %v1634, %v1636
        %v1638 = vrot.slane %v1631, %v1637
        %v1639 = vcombine.low %v1395, %v1403
        %v1641 = vunpack.c.l.s4 1983009808
        %v1642 = vunpack.c.0.s8 %v1641
        %v1643 = vlaneseq
        %v1644 = vshrl.u32 %v1643, 7
        %v1645 = vsub.s32 %v1642, %v1644
        %v1646 = vrot.slane %v1639, %v1645
        %v1647 = vcombine.low %v1416, %v1424
        %v1649 = vunpack.c.l.s4 1983009808
        %v1650 = vunpack.c.0.s8 %v1649
        %v1651 = vlaneseq
        %v1652 = vshrl.u32 %v1651, 7
        %v1653 = vsub.s32 %v1650, %v1652
        %v1654 = vrot.slane %v1647, %v1653
        %v1655 = vcombine.low %v1420, %v1428
        %v1657 = vunpack.c.l.s4 1983009808
        %v1658 = vunpack.c.0.s8 %v1657
        %v1659 = vlaneseq
        %v1660 = vshrl.u32 %v1659, 7
        %v1661 = vsub.s32 %v1658, %v1660
        %v1662 = vrot.slane %v1655, %v1661
        %v1663 = vcombine.low %v1638, %v1646
        %v1664 = vcombine.high %v1638, %v1646
        %v1666 = vunpack.c.l.s4 1934713408
        %v1667 = vunpack.c.0.s8 %v1666
        %v1668 = vlaneseq
        %v1669 = vshrl.u32 %v1668, 7
        %v1670 = vsub.s32 %v1667, %v1669
        %v1671 = vrot.slane %v1663, %v1670
        %v1673 = vunpack.c.l.s4 1934713408
        %v1674 = vunpack.c.0.s8 %v1673
        %v1675 = vlaneseq
        %v1676 = vshrl.u32 %v1675, 7
        %v1677 = vsub.s32 %v1674, %v1676
        %v1678 = vrot.slane %v1664, %v1677
        %v1679 = vcombine.low %v1654, %v1662
        %v1680 = vcombine.high %v1654, %v1662
        %v1682 = vunpack.c.l.s4 1934713408
        %v1683 = vunpack.c.0.s8 %v1682
        %v1684 = vlaneseq
        %v1685 = vshrl.u32 %v1684, 7
        %v1686 = vsub.s32 %v1683, %v1685
        %v1687 = vrot.slane %v1679, %v1686
        %v1689 = vunpack.c.l.s4 1934713408
        %v1690 = vunpack.c.0.s8 %v1689
        %v1691 = vlaneseq
        %v1692 = vshrl.u32 %v1691, 7
        %v1693 = vsub.s32 %v1690, %v1692
        %v1694 = vrot.slane %v1680, %v1693
        %v1695 = vcombine.low %v1671, %v1687
        %v1696 = vcombine.high %v1671, %v1687
        %v1697 = vcombine.low %v1678, %v1694
        %v1698 = vcombine.high %v1678, %v1694
        %v1699 = vcombine.low %v1393, %v1401
        %v1701 = vunpack.c.l.s4 1983009808
        %v1702 = vunpack.c.0.s8 %v1701
        %v1703 = vlaneseq
        %v1704 = vshrl.u32 %v1703, 7
        %v1705 = vsub.s32 %v1702, %v1704
        %v1706 = vrot.slane %v1699, %v1705
        %v1707 = vcombine.low %v1397, %v1405
        %v1709 = vunpack.c.l.s4 1983009808
        %v1710 = vunpack.c.0.s8 %v1709
        %v1711 = vlaneseq
        %v1712 = vshrl.u32 %v1711, 7
        %v1713 = vsub.s32 %v1710, %v1712
        %v1714 = vrot.slane %v1707, %v1713
        %v1715 = vcombine.low %v1418, %v1426
        %v1717 = vunpack.c.l.s4 1983009808
        %v1718 = vunpack.c.0.s8 %v1717
        %v1719 = vlaneseq
        %v1720 = vshrl.u32 %v1719, 7
        %v1721 = vsub.s32 %v1718, %v1720
        %v1722 = vrot.slane %v1715, %v1721
        %v1723 = vcombine.low %v1422, %v1430
        %v1725 = vunpack.c.l.s4 1983009808
        %v1726 = vunpack.c.0.s8 %v1725
        %v1727 = vlaneseq
        %v1728 = vshrl.u32 %v1727, 7
        %v1729 = vsub.s32 %v1726, %v1728
        %v1730 = vrot.slane %v1723, %v1729
        %v1731 = vcombine.low %v1706, %v1714
        %v1732 = vcombine.high %v1706, %v1714
        %v1734 = vunpack.c.l.s4 1934713408
        %v1735 = vunpack.c.0.s8 %v1734
        %v1736 = vlaneseq
        %v1737 = vshrl.u32 %v1736, 7
        %v1738 = vsub.s32 %v1735, %v1737
        %v1739 = vrot.slane %v1731, %v1738
        %v1741 = vunpack.c.l.s4 1934713408
        %v1742 = vunpack.c.0.s8 %v1741
        %v1743 = vlaneseq
        %v1744 = vshrl.u32 %v1743, 7
        %v1745 = vsub.s32 %v1742, %v1744
        %v1746 = vrot.slane %v1732, %v1745
        %v1747 = vcombine.low %v1722, %v1730
        %v1748 = vcombine.high %v1722, %v1730
        %v1750 = vunpack.c.l.s4 1934713408
        %v1751 = vunpack.c.0.s8 %v1750
        %v1752 = vlaneseq
        %v1753 = vshrl.u32 %v1752, 7
        %v1754 = vsub.s32 %v1751, %v1753
        %v1755 = vrot.slane %v1747, %v1754
        %v1757 = vunpack.c.l.s4 1934713408
        %v1758 = vunpack.c.0.s8 %v1757
        %v1759 = vlaneseq
        %v1760 = vshrl.u32 %v1759, 7
        %v1761 = vsub.s32 %v1758, %v1760
        %v1762 = vrot.slane %v1748, %v1761
        %v1763 = vcombine.low %v1739, %v1755
        %v1764 = vcombine.high %v1739, %v1755
        %v1765 = vcombine.low %v1746, %v1762
        %v1766 = vcombine.high %v1746, %v1762
        %v1767 = vcombine.low %v1440, %v1448
        %v1769 = vunpack.c.l.s4 1983009808
        %v1770 = vunpack.c.0.s8 %v1769
        %v1771 = vlaneseq
        %v1772 = vshrl.u32 %v1771, 7
        %v1773 = vsub.s32 %v1770, %v1772
        %v1774 = vrot.slane %v1767, %v1773
        %v1775 = vcombine.low %v1444, %v1452
        %v1777 = vunpack.c.l.s4 1983009808
        %v1778 = vunpack.c.0.s8 %v1777
        %v1779 = vlaneseq
        %v1780 = vshrl.u32 %v1779, 7
        %v1781 = vsub.s32 %v1778, %v1780
        %v1782 = vrot.slane %v1775, %v1781
        %v1783 = vcombine.low %v1468, %v1492
        %v1785 = vunpack.c.l.s4 1983009808
        %v1786 = vunpack.c.0.s8 %v1785
        %v1787 = vlaneseq
        %v1788 = vshrl.u32 %v1787, 7
        %v1789 = vsub.s32 %v1786, %v1788
        %v1790 = vrot.slane %v1783, %v1789
        %v1791 = vcombine.low %v1480, %v1504
        %v1793 = vunpack.c.l.s4 1983009808
        %v1794 = vunpack.c.0.s8 %v1793
        %v1795 = vlaneseq
        %v1796 = vshrl.u32 %v1795, 7
        %v1797 = vsub.s32 %v1794, %v1796
        %v1798 = vrot.slane %v1791, %v1797
        %v1799 = vcombine.low %v1774, %v1782
        %v1800 = vcombine.high %v1774, %v1782
        %v1802 = vunpack.c.l.s4 1934713408
        %v1803 = vunpack.c.0.s8 %v1802
        %v1804 = vlaneseq
        %v1805 = vshrl.u32 %v1804, 7
        %v1806 = vsub.s32 %v1803, %v1805
        %v1807 = vrot.slane %v1799, %v1806
        %v1809 = vunpack.c.l.s4 1934713408
        %v1810 = vunpack.c.0.s8 %v1809
        %v1811 = vlaneseq
        %v1812 = vshrl.u32 %v1811, 7
        %v1813 = vsub.s32 %v1810, %v1812
        %v1814 = vrot.slane %v1800, %v1813
        %v1815 = vcombine.low %v1790, %v1798
        %v1816 = vcombine.high %v1790, %v1798
        %v1818 = vunpack.c.l.s4 1934713408
        %v1819 = vunpack.c.0.s8 %v1818
        %v1820 = vlaneseq
        %v1821 = vshrl.u32 %v1820, 7
        %v1822 = vsub.s32 %v1819, %v1821
        %v1823 = vrot.slane %v1815, %v1822
        %v1825 = vunpack.c.l.s4 1934713408
        %v1826 = vunpack.c.0.s8 %v1825
        %v1827 = vlaneseq
        %v1828 = vshrl.u32 %v1827, 7
        %v1829 = vsub.s32 %v1826, %v1828
        %v1830 = vrot.slane %v1816, %v1829
        %v1831 = vcombine.low %v1807, %v1823
        %v1832 = vcombine.high %v1807, %v1823
        %v1833 = vcombine.low %v1814, %v1830
        %v1834 = vcombine.high %v1814, %v1830
        %v1835 = vcombine.low %v1442, %v1450
        %v1837 = vunpack.c.l.s4 1983009808
        %v1838 = vunpack.c.0.s8 %v1837
        %v1839 = vlaneseq
        %v1840 = vshrl.u32 %v1839, 7
        %v1841 = vsub.s32 %v1838, %v1840
        %v1842 = vrot.slane %v1835, %v1841
        %v1843 = vcombine.low %v1446, %v1454
        %v1845 = vunpack.c.l.s4 1983009808
        %v1846 = vunpack.c.0.s8 %v1845
        %v1847 = vlaneseq
        %v1848 = vshrl.u32 %v1847, 7
        %v1849 = vsub.s32 %v1846, %v1848
        %v1850 = vrot.slane %v1843, %v1849
        %v1851 = vcombine.low %v1474, %v1498
        %v1853 = vunpack.c.l.s4 1983009808
        %v1854 = vunpack.c.0.s8 %v1853
        %v1855 = vlaneseq
        %v1856 = vshrl.u32 %v1855, 7
        %v1857 = vsub.s32 %v1854, %v1856
        %v1858 = vrot.slane %v1851, %v1857
        %v1859 = vcombine.low %v1486, %v1510
        %v1861 = vunpack.c.l.s4 1983009808
        %v1862 = vunpack.c.0.s8 %v1861
        %v1863 = vlaneseq
        %v1864 = vshrl.u32 %v1863, 7
        %v1865 = vsub.s32 %v1862, %v1864
        %v1866 = vrot.slane %v1859, %v1865
        %v1867 = vcombine.low %v1842, %v1850
        %v1868 = vcombine.high %v1842, %v1850
        %v1870 = vunpack.c.l.s4 1934713408
        %v1871 = vunpack.c.0.s8 %v1870
        %v1872 = vlaneseq
        %v1873 = vshrl.u32 %v1872, 7
        %v1874 = vsub.s32 %v1871, %v1873
        %v1875 = vrot.slane %v1867, %v1874
        %v1877 = vunpack.c.l.s4 1934713408
        %v1878 = vunpack.c.0.s8 %v1877
        %v1879 = vlaneseq
        %v1880 = vshrl.u32 %v1879, 7
        %v1881 = vsub.s32 %v1878, %v1880
        %v1882 = vrot.slane %v1868, %v1881
        %v1883 = vcombine.low %v1858, %v1866
        %v1884 = vcombine.high %v1858, %v1866
        %v1886 = vunpack.c.l.s4 1934713408
        %v1887 = vunpack.c.0.s8 %v1886
        %v1888 = vlaneseq
        %v1889 = vshrl.u32 %v1888, 7
        %v1890 = vsub.s32 %v1887, %v1889
        %v1891 = vrot.slane %v1883, %v1890
        %v1893 = vunpack.c.l.s4 1934713408
        %v1894 = vunpack.c.0.s8 %v1893
        %v1895 = vlaneseq
        %v1896 = vshrl.u32 %v1895, 7
        %v1897 = vsub.s32 %v1894, %v1896
        %v1898 = vrot.slane %v1884, %v1897
        %v1899 = vcombine.low %v1875, %v1891
        %v1900 = vcombine.high %v1875, %v1891
        %v1901 = vcombine.low %v1882, %v1898
        %v1902 = vcombine.high %v1882, %v1898
        %v1903 = vcombine.low %v1520, %v1528
        %v1905 = vunpack.c.l.s4 1983009808
        %v1906 = vunpack.c.0.s8 %v1905
        %v1907 = vlaneseq
        %v1908 = vshrl.u32 %v1907, 7
        %v1909 = vsub.s32 %v1906, %v1908
        %v1910 = vrot.slane %v1903, %v1909
        %v1911 = vcombine.low %v1524, %v1532
        %v1913 = vunpack.c.l.s4 1983009808
        %v1914 = vunpack.c.0.s8 %v1913
        %v1915 = vlaneseq
        %v1916 = vshrl.u32 %v1915, 7
        %v1917 = vsub.s32 %v1914, %v1916
        %v1918 = vrot.slane %v1911, %v1917
        %v1919 = vcombine.low %v1544, %v1552
        %v1921 = vunpack.c.l.s4 1983009808
        %v1922 = vunpack.c.0.s8 %v1921
        %v1923 = vlaneseq
        %v1924 = vshrl.u32 %v1923, 7
        %v1925 = vsub.s32 %v1922, %v1924
        %v1926 = vrot.slane %v1919, %v1925
        %v1927 = vcombine.low %v1548, %v1556
        %v1929 = vunpack.c.l.s4 1983009808
        %v1930 = vunpack.c.0.s8 %v1929
        %v1931 = vlaneseq
        %v1932 = vshrl.u32 %v1931, 7
        %v1933 = vsub.s32 %v1930, %v1932
        %v1934 = vrot.slane %v1927, %v1933
        %v1935 = vcombine.low %v1910, %v1918
        %v1936 = vcombine.high %v1910, %v1918
        %v1938 = vunpack.c.l.s4 1934713408
        %v1939 = vunpack.c.0.s8 %v1938
        %v1940 = vlaneseq
        %v1941 = vshrl.u32 %v1940, 7
        %v1942 = vsub.s32 %v1939, %v1941
        %v1943 = vrot.slane %v1935, %v1942
        %v1945 = vunpack.c.l.s4 1934713408
        %v1946 = vunpack.c.0.s8 %v1945
        %v1947 = vlaneseq
        %v1948 = vshrl.u32 %v1947, 7
        %v1949 = vsub.s32 %v1946, %v1948
        %v1950 = vrot.slane %v1936, %v1949
        %v1951 = vcombine.low %v1926, %v1934
        %v1952 = vcombine.high %v1926, %v1934
        %v1954 = vunpack.c.l.s4 1934713408
        %v1955 = vunpack.c.0.s8 %v1954
        %v1956 = vlaneseq
        %v1957 = vshrl.u32 %v1956, 7
        %v1958 = vsub.s32 %v1955, %v1957
        %v1959 = vrot.slane %v1951, %v1958
        %v1961 = vunpack.c.l.s4 1934713408
        %v1962 = vunpack.c.0.s8 %v1961
        %v1963 = vlaneseq
        %v1964 = vshrl.u32 %v1963, 7
        %v1965 = vsub.s32 %v1962, %v1964
        %v1966 = vrot.slane %v1952, %v1965
        %v1967 = vcombine.low %v1943, %v1959
        %v1968 = vcombine.high %v1943, %v1959
        %v1969 = vcombine.low %v1950, %v1966
        %v1970 = vcombine.high %v1950, %v1966
        %v1971 = vcombine.low %v1522, %v1530
        %v1973 = vunpack.c.l.s4 1983009808
        %v1974 = vunpack.c.0.s8 %v1973
        %v1975 = vlaneseq
        %v1976 = vshrl.u32 %v1975, 7
        %v1977 = vsub.s32 %v1974, %v1976
        %v1978 = vrot.slane %v1971, %v1977
        %v1979 = vcombine.low %v1526, %v1534
        %v1981 = vunpack.c.l.s4 1983009808
        %v1982 = vunpack.c.0.s8 %v1981
        %v1983 = vlaneseq
        %v1984 = vshrl.u32 %v1983, 7
        %v1985 = vsub.s32 %v1982, %v1984
        %v1986 = vrot.slane %v1979, %v1985
        %v1987 = vcombine.low %v1546, %v1554
        %v1989 = vunpack.c.l.s4 1983009808
        %v1990 = vunpack.c.0.s8 %v1989
        %v1991 = vlaneseq
        %v1992 = vshrl.u32 %v1991, 7
        %v1993 = vsub.s32 %v1990, %v1992
        %v1994 = vrot.slane %v1987, %v1993
        %v1995 = vcombine.low %v1550, %v1558
        %v1997 = vunpack.c.l.s4 1983009808
        %v1998 = vunpack.c.0.s8 %v1997
        %v1999 = vlaneseq
        %v2000 = vshrl.u32 %v1999, 7
        %v2001 = vsub.s32 %v1998, %v2000
        %v2002 = vrot.slane %v1995, %v2001
        %v2003 = vcombine.low %v1978, %v1986
        %v2004 = vcombine.high %v1978, %v1986
        %v2006 = vunpack.c.l.s4 1934713408
        %v2007 = vunpack.c.0.s8 %v2006
        %v2008 = vlaneseq
        %v2009 = vshrl.u32 %v2008, 7
        %v2010 = vsub.s32 %v2007, %v2009
        %v2011 = vrot.slane %v2003, %v2010
        %v2013 = vunpack.c.l.s4 1934713408
        %v2014 = vunpack.c.0.s8 %v2013
        %v2015 = vlaneseq
        %v2016 = vshrl.u32 %v2015, 7
        %v2017 = vsub.s32 %v2014, %v2016
        %v2018 = vrot.slane %v2004, %v2017
        %v2019 = vcombine.low %v1994, %v2002
        %v2020 = vcombine.high %v1994, %v2002
        %v2022 = vunpack.c.l.s4 1934713408
        %v2023 = vunpack.c.0.s8 %v2022
        %v2024 = vlaneseq
        %v2025 = vshrl.u32 %v2024, 7
        %v2026 = vsub.s32 %v2023, %v2025
        %v2027 = vrot.slane %v2019, %v2026
        %v2029 = vunpack.c.l.s4 1934713408
        %v2030 = vunpack.c.0.s8 %v2029
        %v2031 = vlaneseq
        %v2032 = vshrl.u32 %v2031, 7
        %v2033 = vsub.s32 %v2030, %v2032
        %v2034 = vrot.slane %v2020, %v2033
        %v2035 = vcombine.low %v2011, %v2027
        %v2036 = vcombine.high %v2011, %v2027
        %v2037 = vcombine.low %v2018, %v2034
        %v2038 = vcombine.high %v2018, %v2034
        %v2039 = vcombine.low %v1567, %v1571
        %v2041 = vunpack.c.l.s4 1983009808
        %v2042 = vunpack.c.0.s8 %v2041
        %v2043 = vlaneseq
        %v2044 = vshrl.u32 %v2043, 7
        %v2045 = vsub.s32 %v2042, %v2044
        %v2046 = vrot.slane %v2039, %v2045
        %v2047 = vcombine.low %v1569, %v1573
        %v2049 = vunpack.c.l.s4 1983009808
        %v2050 = vunpack.c.0.s8 %v2049
        %v2051 = vlaneseq
        %v2052 = vshrl.u32 %v2051, 7
        %v2053 = vsub.s32 %v2050, %v2052
        %v2054 = vrot.slane %v2047, %v2053
        %v2055 = vcombine.low %v1584, %v1592
        %v2057 = vunpack.c.l.s4 1983009808
        %v2058 = vunpack.c.0.s8 %v2057
        %v2059 = vlaneseq
        %v2060 = vshrl.u32 %v2059, 7
        %v2061 = vsub.s32 %v2058, %v2060
        %v2062 = vrot.slane %v2055, %v2061
        %v2063 = vcombine.low %v1588, %v1596
        %v2065 = vunpack.c.l.s4 1983009808
        %v2066 = vunpack.c.0.s8 %v2065
        %v2067 = vlaneseq
        %v2068 = vshrl.u32 %v2067, 7
        %v2069 = vsub.s32 %v2066, %v2068
        %v2070 = vrot.slane %v2063, %v2069
        %v2071 = vcombine.low %v2046, %v2054
        %v2072 = vcombine.high %v2046, %v2054
        %v2074 = vunpack.c.l.s4 1934713408
        %v2075 = vunpack.c.0.s8 %v2074
        %v2076 = vlaneseq
        %v2077 = vshrl.u32 %v2076, 7
        %v2078 = vsub.s32 %v2075, %v2077
        %v2079 = vrot.slane %v2071, %v2078
        %v2081 = vunpack.c.l.s4 1934713408
        %v2082 = vunpack.c.0.s8 %v2081
        %v2083 = vlaneseq
        %v2084 = vshrl.u32 %v2083, 7
        %v2085 = vsub.s32 %v2082, %v2084
        %v2086 = vrot.slane %v2072, %v2085
        %v2087 = vcombine.low %v2062, %v2070
        %v2088 = vcombine.high %v2062, %v2070
        %v2090 = vunpack.c.l.s4 1934713408
        %v2091 = vunpack.c.0.s8 %v2090
        %v2092 = vlaneseq
        %v2093 = vshrl.u32 %v2092, 7
        %v2094 = vsub.s32 %v2091, %v2093
        %v2095 = vrot.slane %v2087, %v2094
        %v2097 = vunpack.c.l.s4 1934713408
        %v2098 = vunpack.c.0.s8 %v2097
        %v2099 = vlaneseq
        %v2100 = vshrl.u32 %v2099, 7
        %v2101 = vsub.s32 %v2098, %v2100
        %v2102 = vrot.slane %v2088, %v2101
        %v2103 = vcombine.low %v2079, %v2095
        %v2104 = vcombine.high %v2079, %v2095
        %v2105 = vcombine.low %v2086, %v2102
        %v2106 = vcombine.high %v2086, %v2102
        %v2107 = vcombine.low %v1568, %v1572
        %v2109 = vunpack.c.l.s4 1983009808
        %v2110 = vunpack.c.0.s8 %v2109
        %v2111 = vlaneseq
        %v2112 = vshrl.u32 %v2111, 7
        %v2113 = vsub.s32 %v2110, %v2112
        %v2114 = vrot.slane %v2107, %v2113
        %v2115 = vcombine.low %v1570, %v1574
        %v2117 = vunpack.c.l.s4 1983009808
        %v2118 = vunpack.c.0.s8 %v2117
        %v2119 = vlaneseq
        %v2120 = vshrl.u32 %v2119, 7
        %v2121 = vsub.s32 %v2118, %v2120
        %v2122 = vrot.slane %v2115, %v2121
        %v2123 = vcombine.low %v1586, %v1594
        %v2125 = vunpack.c.l.s4 1983009808
        %v2126 = vunpack.c.0.s8 %v2125
        %v2127 = vlaneseq
        %v2128 = vshrl.u32 %v2127, 7
        %v2129 = vsub.s32 %v2126, %v2128
        %v2130 = vrot.slane %v2123, %v2129
        %v2131 = vcombine.low %v1590, %v1598
        %v2133 = vunpack.c.l.s4 1983009808
        %v2134 = vunpack.c.0.s8 %v2133
        %v2135 = vlaneseq
        %v2136 = vshrl.u32 %v2135, 7
        %v2137 = vsub.s32 %v2134, %v2136
        %v2138 = vrot.slane %v2131, %v2137
        %v2139 = vcombine.low %v2114, %v2122
        %v2140 = vcombine.high %v2114, %v2122
        %v2142 = vunpack.c.l.s4 1934713408
        %v2143 = vunpack.c.0.s8 %v2142
        %v2144 = vlaneseq
        %v2145 = vshrl.u32 %v2144, 7
        %v2146 = vsub.s32 %v2143, %v2145
        %v2147 = vrot.slane %v2139, %v2146
        %v2149 = vunpack.c.l.s4 1934713408
        %v2150 = vunpack.c.0.s8 %v2149
        %v2151 = vlaneseq
        %v2152 = vshrl.u32 %v2151, 7
        %v2153 = vsub.s32 %v2150, %v2152
        %v2154 = vrot.slane %v2140, %v2153
        %v2155 = vcombine.low %v2130, %v2138
        %v2156 = vcombine.high %v2130, %v2138
        %v2158 = vunpack.c.l.s4 1934713408
        %v2159 = vunpack.c.0.s8 %v2158
        %v2160 = vlaneseq
        %v2161 = vshrl.u32 %v2160, 7
        %v2162 = vsub.s32 %v2159, %v2161
        %v2163 = vrot.slane %v2155, %v2162
        %v2165 = vunpack.c.l.s4 1934713408
        %v2166 = vunpack.c.0.s8 %v2165
        %v2167 = vlaneseq
        %v2168 = vshrl.u32 %v2167, 7
        %v2169 = vsub.s32 %v2166, %v2168
        %v2170 = vrot.slane %v2156, %v2169
        %v2171 = vcombine.low %v2147, %v2163
        %v2172 = vcombine.high %v2147, %v2163
        %v2173 = vcombine.low %v2154, %v2170
        %v2174 = vcombine.high %v2154, %v2170
        %v2175 = vcombine.low %v1608, %v1616
        %v2177 = vunpack.c.l.s4 1983009808
        %v2178 = vunpack.c.0.s8 %v2177
        %v2179 = vlaneseq
        %v2180 = vshrl.u32 %v2179, 7
        %v2181 = vsub.s32 %v2178, %v2180
        %v2182 = vrot.slane %v2175, %v2181
        %v2183 = vcombine.low %v1612, %v1620
        %v2185 = vunpack.c.l.s4 1983009808
        %v2186 = vunpack.c.0.s8 %v2185
        %v2187 = vlaneseq
        %v2188 = vshrl.u32 %v2187, 7
        %v2189 = vsub.s32 %v2186, %v2188
        %v2190 = vrot.slane %v2183, %v2189
        %v2191 = vcombine.low %v2182, %v2190
        %v2192 = vcombine.high %v2182, %v2190
        %v2194 = vunpack.c.l.s4 1934713408
        %v2195 = vunpack.c.0.s8 %v2194
        %v2196 = vlaneseq
        %v2197 = vshrl.u32 %v2196, 7
        %v2198 = vsub.s32 %v2195, %v2197
        %v2199 = vrot.slane %v2191, %v2198
        %v2201 = vunpack.c.l.s4 1934713408
        %v2202 = vunpack.c.0.s8 %v2201
        %v2203 = vlaneseq
        %v2204 = vshrl.u32 %v2203, 7
        %v2205 = vsub.s32 %v2202, %v2204
        %v2206 = vrot.slane %v2192, %v2205
        %v2207 = vcombine.high %v2199, 0
        %v2208 = vcombine.high %v2206, 0
        %v2209 = vcombine.low %v1610, %v1618
        %v2211 = vunpack.c.l.s4 1983009808
        %v2212 = vunpack.c.0.s8 %v2211
        %v2213 = vlaneseq
        %v2214 = vshrl.u32 %v2213, 7
        %v2215 = vsub.s32 %v2212, %v2214
        %v2216 = vrot.slane %v2209, %v2215
        %v2217 = vcombine.low %v1614, %v1622
        %v2219 = vunpack.c.l.s4 1983009808
        %v2220 = vunpack.c.0.s8 %v2219
        %v2221 = vlaneseq
        %v2222 = vshrl.u32 %v2221, 7
        %v2223 = vsub.s32 %v2220, %v2222
        %v2224 = vrot.slane %v2217, %v2223
        %v2225 = vcombine.low %v2216, %v2224
        %v2226 = vcombine.high %v2216, %v2224
        %v2228 = vunpack.c.l.s4 1934713408
        %v2229 = vunpack.c.0.s8 %v2228
        %v2230 = vlaneseq
        %v2231 = vshrl.u32 %v2230, 7
        %v2232 = vsub.s32 %v2229, %v2231
        %v2233 = vrot.slane %v2225, %v2232
        %v2235 = vunpack.c.l.s4 1934713408
        %v2236 = vunpack.c.0.s8 %v2235
        %v2237 = vlaneseq
        %v2238 = vshrl.u32 %v2237, 7
        %v2239 = vsub.s32 %v2236, %v2238
        %v2240 = vrot.slane %v2226, %v2239
        %v2241 = vcombine.high %v2233, 0
        %v2242 = vcombine.high %v2240, 0
        %v2245 = vpack.i.b16 %v1763, %v1695
        %v2246 = vshrl.u32 %v1695, 16
        %v2247 = vshrl.u32 %v1763, 16
        %v2248 = vpack.i.b16 %v2247, %v2246
        %v2251 = vpack.i.b16 %v1764, %v1696
        %v2252 = vshrl.u32 %v1696, 16
        %v2253 = vshrl.u32 %v1764, 16
        %v2254 = vpack.i.b16 %v2253, %v2252
        %v2257 = vpack.i.b16 %v1765, %v1697
        %v2258 = vshrl.u32 %v1697, 16
        %v2259 = vshrl.u32 %v1765, 16
        %v2260 = vpack.i.b16 %v2259, %v2258
        %v2263 = vpack.i.b16 %v1766, %v1698
        %v2264 = vshrl.u32 %v1698, 16
        %v2265 = vshrl.u32 %v1766, 16
        %v2266 = vpack.i.b16 %v2265, %v2264
        %v2269 = vpack.i.b16 %v1899, %v1831
        %v2270 = vshrl.u32 %v1831, 16
        %v2271 = vshrl.u32 %v1899, 16
        %v2272 = vpack.i.b16 %v2271, %v2270
        %v2275 = vpack.i.b16 %v1900, %v1832
        %v2276 = vshrl.u32 %v1832, 16
        %v2277 = vshrl.u32 %v1900, 16
        %v2278 = vpack.i.b16 %v2277, %v2276
        %v2281 = vpack.i.b16 %v1901, %v1833
        %v2282 = vshrl.u32 %v1833, 16
        %v2283 = vshrl.u32 %v1901, 16
        %v2284 = vpack.i.b16 %v2283, %v2282
        %v2287 = vpack.i.b16 %v1902, %v1834
        %v2288 = vshrl.u32 %v1834, 16
        %v2289 = vshrl.u32 %v1902, 16
        %v2290 = vpack.i.b16 %v2289, %v2288
        %v2293 = vpack.i.b16 %v2035, %v1967
        %v2294 = vshrl.u32 %v1967, 16
        %v2295 = vshrl.u32 %v2035, 16
        %v2296 = vpack.i.b16 %v2295, %v2294
        %v2299 = vpack.i.b16 %v2036, %v1968
        %v2300 = vshrl.u32 %v1968, 16
        %v2301 = vshrl.u32 %v2036, 16
        %v2302 = vpack.i.b16 %v2301, %v2300
        %v2305 = vpack.i.b16 %v2037, %v1969
        %v2306 = vshrl.u32 %v1969, 16
        %v2307 = vshrl.u32 %v2037, 16
        %v2308 = vpack.i.b16 %v2307, %v2306
        %v2311 = vpack.i.b16 %v2038, %v1970
        %v2312 = vshrl.u32 %v1970, 16
        %v2313 = vshrl.u32 %v2038, 16
        %v2314 = vpack.i.b16 %v2313, %v2312
        %v2317 = vpack.i.b16 %v2171, %v2103
        %v2318 = vshrl.u32 %v2103, 16
        %v2319 = vshrl.u32 %v2171, 16
        %v2320 = vpack.i.b16 %v2319, %v2318
        %v2323 = vpack.i.b16 %v2172, %v2104
        %v2324 = vshrl.u32 %v2104, 16
        %v2325 = vshrl.u32 %v2172, 16
        %v2326 = vpack.i.b16 %v2325, %v2324
        %v2329 = vpack.i.b16 %v2173, %v2105
        %v2330 = vshrl.u32 %v2105, 16
        %v2331 = vshrl.u32 %v2173, 16
        %v2332 = vpack.i.b16 %v2331, %v2330
        %v2335 = vpack.i.b16 %v2174, %v2106
        %v2336 = vshrl.u32 %v2106, 16
        %v2337 = vshrl.u32 %v2174, 16
        %v2338 = vpack.i.b16 %v2337, %v2336
        %v2341 = vpack.i.b16 %v2233, %v2199
        %v2342 = vshrl.u32 %v2199, 16
        %v2343 = vshrl.u32 %v2233, 16
        %v2344 = vpack.i.b16 %v2343, %v2342
        %v2347 = vpack.i.b16 %v2241, %v2207
        %v2348 = vshrl.u32 %v2207, 16
        %v2349 = vshrl.u32 %v2241, 16
        %v2350 = vpack.i.b16 %v2349, %v2348
        %v2353 = vpack.i.b16 %v2240, %v2206
        %v2354 = vshrl.u32 %v2206, 16
        %v2355 = vshrl.u32 %v2240, 16
        %v2356 = vpack.i.b16 %v2355, %v2354
        %v2359 = vpack.i.b16 %v2242, %v2208
        %v2360 = vshrl.u32 %v2208, 16
        %v2361 = vshrl.u32 %v2242, 16
        %v2362 = vpack.i.b16 %v2361, %v2360
        %2363 = vrot.lane.b32.xlu0 %v2248, 8
        %v2364 = vpop.permute.xlu0 %2363
        %2365 = vrot.lane.b32.xlu0 %v2272, 8
        %v2366 = vpop.permute.xlu0 %2365
        %2367 = vrot.lane.b32.xlu0 %v2296, 8
        %v2368 = vpop.permute.xlu0 %2367
        %2369 = vrot.lane.b32.xlu0 %v2320, 8
        %v2370 = vpop.permute.xlu0 %2369
        %2371 = vrot.lane.b32.xlu0 %v2344, 8
        %v2372 = vpop.permute.xlu0 %2371
        %2373 = vrot.lane.b32.xlu0 %v2251, 16
        %v2374 = vpop.permute.xlu0 %2373
        %2375 = vrot.lane.b32.xlu0 %v2275, 16
        %v2376 = vpop.permute.xlu0 %2375
        %2377 = vrot.lane.b32.xlu0 %v2299, 16
        %v2378 = vpop.permute.xlu0 %2377
        %2379 = vrot.lane.b32.xlu0 %v2323, 16
        %v2380 = vpop.permute.xlu0 %2379
        %2381 = vrot.lane.b32.xlu0 %v2347, 16
        %v2382 = vpop.permute.xlu0 %2381
        %2383 = vrot.lane.b32.xlu0 %v2254, 24
        %v2384 = vpop.permute.xlu0 %2383
        %2385 = vrot.lane.b32.xlu0 %v2278, 24
        %v2386 = vpop.permute.xlu0 %2385
        %2387 = vrot.lane.b32.xlu0 %v2302, 24
        %v2388 = vpop.permute.xlu0 %2387
        %2389 = vrot.lane.b32.xlu0 %v2326, 24
        %v2390 = vpop.permute.xlu0 %2389
        %2391 = vrot.lane.b32.xlu0 %v2350, 24
        %v2392 = vpop.permute.xlu0 %2391
        %2393 = vrot.lane.b32.xlu0 %v2257, 32
        %v2394 = vpop.permute.xlu0 %2393
        %2395 = vrot.lane.b32.xlu0 %v2281, 32
        %v2396 = vpop.permute.xlu0 %2395
        %2397 = vrot.lane.b32.xlu0 %v2305, 32
        %v2398 = vpop.permute.xlu0 %2397
        %2399 = vrot.lane.b32.xlu0 %v2329, 32
        %v2400 = vpop.permute.xlu0 %2399
        %2401 = vrot.lane.b32.xlu0 %v2353, 32
        %v2402 = vpop.permute.xlu0 %2401
        %2403 = vrot.lane.b32.xlu0 %v2260, 40
        %v2404 = vpop.permute.xlu0 %2403
        %2405 = vrot.lane.b32.xlu0 %v2284, 40
        %v2406 = vpop.permute.xlu0 %2405
        %2407 = vrot.lane.b32.xlu0 %v2308, 40
        %v2408 = vpop.permute.xlu0 %2407
        %2409 = vrot.lane.b32.xlu0 %v2332, 40
        %v2410 = vpop.permute.xlu0 %2409
        %2411 = vrot.lane.b32.xlu0 %v2356, 40
        %v2412 = vpop.permute.xlu0 %2411
        %2413 = vrot.lane.b32.xlu0 %v2263, 48
        %v2414 = vpop.permute.xlu0 %2413
        %2415 = vrot.lane.b32.xlu0 %v2287, 48
        %v2416 = vpop.permute.xlu0 %2415
        %2417 = vrot.lane.b32.xlu0 %v2311, 48
        %v2418 = vpop.permute.xlu0 %2417
        %2419 = vrot.lane.b32.xlu0 %v2335, 48
        %v2420 = vpop.permute.xlu0 %2419
        %2421 = vrot.lane.b32.xlu0 %v2359, 48
        %v2422 = vpop.permute.xlu0 %2421
        %2423 = vrot.lane.b32.xlu0 %v2266, 56
        %v2424 = vpop.permute.xlu0 %2423
        %2425 = vrot.lane.b32.xlu0 %v2290, 56
        %v2426 = vpop.permute.xlu0 %2425
        %2427 = vrot.lane.b32.xlu0 %v2314, 56
        %v2428 = vpop.permute.xlu0 %2427
        %2429 = vrot.lane.b32.xlu0 %v2338, 56
        %v2430 = vpop.permute.xlu0 %2429
        %2431 = vrot.lane.b32.xlu0 %v2362, 56
        %v2432 = vpop.permute.xlu0 %2431
        %v2435 = vsel %vm1033, %v2245, %v2364
        %v2438 = vsel %vm1033, %v2269, %v2366
        %v2441 = vsel %vm1033, %v2293, %v2368
        %v2444 = vsel %vm1033, %v2317, %v2370
        %v2447 = vsel %vm1033, %v2341, %v2372
        %v2449 = vsel %vm1043, %v2435, %v2374
        %v2451 = vsel %vm1043, %v2438, %v2376
        %v2453 = vsel %vm1043, %v2441, %v2378
        %v2455 = vsel %vm1043, %v2444, %v2380
        %v2457 = vsel %vm1043, %v2447, %v2382
        %v2459 = vsel %vm1050, %v2449, %v2384
        %v2461 = vsel %vm1050, %v2451, %v2386
        %v2463 = vsel %vm1050, %v2453, %v2388
        %v2465 = vsel %vm1050, %v2455, %v2390
        %v2467 = vsel %vm1050, %v2457, %v2392
        %v2469 = vsel %vm1057, %v2459, %v2394
        %v2471 = vsel %vm1057, %v2461, %v2396
        %v2473 = vsel %vm1057, %v2463, %v2398
        %v2475 = vsel %vm1057, %v2465, %v2400
        %v2477 = vsel %vm1057, %v2467, %v2402
        %v2479 = vsel %vm1064, %v2469, %v2404
        %v2481 = vsel %vm1064, %v2471, %v2406
        %v2483 = vsel %vm1064, %v2473, %v2408
        %v2485 = vsel %vm1064, %v2475, %v2410
        %v2487 = vsel %vm1064, %v2477, %v2412
        %v2489 = vsel %vm1071, %v2479, %v2414
        %v2491 = vsel %vm1071, %v2481, %v2416
        %v2493 = vsel %vm1071, %v2483, %v2418
        %v2495 = vsel %vm1071, %v2485, %v2420
        %v2497 = vsel %vm1071, %v2487, %v2422
        %v2499 = vsel %vm1078, %v2489, %v2424
        %v2502 = vsel %vm1078, %v2491, %v2426
        %v2505 = vsel %vm1078, %v2493, %v2428
        %v2508 = vsel %vm1078, %v2495, %v2430
        %v2511 = vsel %vm1078, %v2497, %v2432
        %v2512 = vld [vmem:[%s2] sm:$0xf]
        %vm2513 = vcmask 588800
        %v2515 = vsel %vm2513, %v2512, 0
        %vm2517 = vcmask 1043456
        %v2518 = vsel %vm2517, %v2511, 0
        %2520 = vmatprep.subr.bf16.mxu0 0
        %2521 = vmatpush1.bf16.msra.mxu0 %v2499
        %2522 = vmatprep.subr.bf16.mxu0 0
        %2523 = vmatpush1.bf16.msra.mxu0 %v2502
        %2524 = vmatprep.subr.bf16.mxu0 0
        %2525 = vmatpush1.bf16.msra.mxu0 %v2505
        %2526 = vmatprep.subr.bf16.mxu0 0
        %2527 = vmatpush1.bf16.msra.mxu0 %v2508
        %2528 = vmatprep.subr.bf16.mxu0 0
        %2529 = vmatpush1.bf16.msra.mxu0 %v2518
        %2530 = vmatprep.subr.bf16.mxu0 0
        %2531 = vmatpush1.bf16.msra.mxu0 0
        %2532 = vmatprep.subr.bf16.mxu0 0
        %2533 = vmatpush1.bf16.msra.mxu0 0
        %2534 = vmatprep.subr.bf16.mxu0 0
        %2535 = vmatpush1.bf16.msra.mxu0 0
        %2536 = vmatprep.subr.bf16.mxu0 0
        %2537 = vmatpush1.bf16.msra.mxu0 0
        %2538 = vmatprep.subr.bf16.mxu0 0
        %2539 = vmatpush1.bf16.msra.mxu0 0
        %2540 = vmatprep.subr.bf16.mxu0 0
        %2541 = vmatpush1.bf16.msra.mxu0 0
        %2542 = vmatprep.subr.bf16.mxu0 0
        %2543 = vmatpush1.bf16.msra.mxu0 0
        %2544 = vmatprep.subr.bf16.mxu0 0
        %2545 = vmatpush1.bf16.msra.mxu0 0
        %2546 = vmatprep.subr.bf16.mxu0 0
        %2547 = vmatpush1.bf16.msra.mxu0 0
        %2548 = vmatprep.subr.bf16.mxu0 0
        %2549 = vmatpush1.bf16.msra.mxu0 0
        %2550 = vmatprep.subr.bf16.mxu0 0
        %2551 = vmatpush1.bf16.msra.mxu0 0
        %2552 = vmatprep.mubr.bf16.mxu0 0
        %2553 = vmatmul.mubr.bf16.gmra.mrb[0].mxu0 %v2515
        %v2554 = vpop.f32.mrb[0].mxu0
        %v2555 = vadd.f32 0.0, %v2554
        %v2556 = vpop.f32.mrb[0].mxu0
        %v2557 = vpop.f32.mrb[0].mxu0
        %v2558 = vpop.f32.mrb[0].mxu0
        %2559 = vdwg.mxu0
        %2560 = vset.pattern.permute.xlu0 2
        %2561 = vperm.xlu0 %2560, %v275
        %v2562 = vpop.permute.xlu0 %2561
        %v2564 = vmul.f32 %v2555, %v2562
        %2565 = vset.pattern.permute.xlu0 3
        %2566 = vperm.xlu0 %2565, %v275
        %v2567 = vpop.permute.xlu0 %2566
        %v2569 = vadd.f32 %v2564, %v2567
        %v2570 = vmax.f32 %v2569, 0.0
        %v2571 = vld [vmem:[%s3] sm:$0x3]
        %v2572 = vpack.c.bf16 %v2570, %v2570
        %v2573 = vld [vmem:[%s5] sm:$0xf]
        %2575 = vset.pattern.permute.xlu0 0
        %2576 = vperm.xlu0 %2575, %v2573
        %v2577 = vpop.permute.xlu0 %2576
        %v2580 = vsel %vm1033, %v2571, 0
        %v2583 = vsel %vm2517, %v2572, 0
        %2585 = vmatprep.subr.bf16.mxu0 0
        %2586 = vmatpush1.bf16.msra.mxu0 %v2583
        %2587 = vmatprep.subr.bf16.mxu0 0
        %2588 = vmatpush1.bf16.msra.mxu0 0
        %2589 = vmatprep.subr.bf16.mxu0 0
        %2590 = vmatpush1.bf16.msra.mxu0 0
        %2591 = vmatprep.subr.bf16.mxu0 0
        %2592 = vmatpush1.bf16.msra.mxu0 0
        %2593 = vmatprep.subr.bf16.mxu0 0
        %2594 = vmatpush1.bf16.msra.mxu0 0
        %2595 = vmatprep.subr.bf16.mxu0 0
        %2596 = vmatpush1.bf16.msra.mxu0 0
        %2597 = vmatprep.subr.bf16.mxu0 0
        %2598 = vmatpush1.bf16.msra.mxu0 0
        %2599 = vmatprep.subr.bf16.mxu0 0
        %2600 = vmatpush1.bf16.msra.mxu0 0
        %2601 = vmatprep.subr.bf16.mxu0 0
        %2602 = vmatpush1.bf16.msra.mxu0 0
        %2603 = vmatprep.subr.bf16.mxu0 0
        %2604 = vmatpush1.bf16.msra.mxu0 0
        %2605 = vmatprep.subr.bf16.mxu0 0
        %2606 = vmatpush1.bf16.msra.mxu0 0
        %2607 = vmatprep.subr.bf16.mxu0 0
        %2608 = vmatpush1.bf16.msra.mxu0 0
        %2609 = vmatprep.subr.bf16.mxu0 0
        %2610 = vmatpush1.bf16.msra.mxu0 0
        %2611 = vmatprep.subr.bf16.mxu0 0
        %2612 = vmatpush1.bf16.msra.mxu0 0
        %2613 = vmatprep.subr.bf16.mxu0 0
        %2614 = vmatpush1.bf16.msra.mxu0 0
        %2615 = vmatprep.subr.bf16.mxu0 0
        %2616 = vmatpush1.bf16.msra.mxu0 0
        %2617 = vmatprep.mubr.bf16.mxu0 0
        %2618 = vmatmul.mubr.bf16.gmra.mrb[0].mxu0 %v2580
        %v2619 = vpop.f32.mrb[0].mxu0
        %v2620 = vadd.f32 %v2577, %v2619
        %v2621 = vpop.f32.mrb[0].mxu0
        %v2622 = vpop.f32.mrb[0].mxu0
        %v2623 = vpop.f32.mrb[0].mxu0
        %2624 = vdwg.mxu0
        %vm2625 = vcmask 519168
        %2626 = vst.msk [vmem:[%s244] sm:$0xf] %vm2625, %v2620
        %s2627 = sand.u32 %s159, 1
        %s2628 = scalar_lea.sflag [#allocation3], %s2627
        %s2629 = sand.u32 %s159, 1
        %s2630 = smul.addr %s2629, 4
        %s2631 = scalar_lea.vmem [#allocation2], %s2630
        // Predicated region
        $region45: #{tpu_custom_call.1} parent=43 // pred_check
          %p2632 = pneg %p169
        $region46: #{tpu_custom_call.1} parent=43 // pred_check_branch
          %2634 = sbr.rel (%p2632) target = $region48
        $region47: #{tpu_custom_call.1} parent=43 // pred_region
          %s2636 = ssub.s32 64, 64
          %2637 = vsyncadd %s2628, %s2636
          %s2638 = smul.addr %s20, 64
          %s2639 = scalar_lea.hbm %s6, %s2638
          %s2641 = sshll.u32 %s2631, 4
          %s2642 = int_to_ptr.vmem [resolvable:$true] %s2641
          %2644 = dma.vmem_to_hbm [thread:$0]  %s2642, 64, %s2639, %s2628
        $region48: #{tpu_custom_call.1} parent=43 // pred_fallthru
          _
      $region44: #{tpu_custom_call.1} parent=5 // pred_fallthru
        _
      %p2645 = scmp.le.s32.totalorder 2, %s15
      // Predicated region
      $region49: #{tpu_custom_call.1} parent=5 // pred_check
        %p2646 = pneg %p2645
      $region50: #{tpu_custom_call.1} parent=5 // pred_check_branch
        %2648 = sbr.rel (%p2646) target = $region52
      $region51: #{tpu_custom_call.1} parent=5 // pred_region
        %s2649 = ssub.s32 %s15, 2
        // Predicated region
        $region53: #{tpu_custom_call.1} parent=51 // pred_check
          %p2650 = pneg %p175
        $region54: #{tpu_custom_call.1} parent=51 // pred_check_branch
          %2652 = sbr.rel (%p2650) target = $region56
        $region55: #{tpu_custom_call.1} parent=51 // pred_region
          %s2653 = sand.u32 %s160, 1
          %s2654 = scalar_lea.sflag [#allocation3], %s2653
          %s2655 = sand.u32 %s160, 1
          %s2656 = smul.addr %s2655, 4
          %s2657 = scalar_lea.vmem [#allocation2], %s2656
          %2658 = dma.done %s2654, 64
        $region56: #{tpu_custom_call.1} parent=51 // pred_fallthru
          _
      $region52: #{tpu_custom_call.1} parent=5 // pred_fallthru
        _
    $region6: #{tpu_custom_call.1} parent=1 // loop_footer
      %s19 = sadd.s32 1, %s15
    $region7: #{tpu_custom_call.1} parent=1 // loop_footer_branch
      %14 = sbr.rel target = $region3
    $region8: #{tpu_custom_call.1} parent=1 // loop_exit
      _
    %2659 = vsyncpa [#allocation3], 1
    %s2660 = scalar_lea.sflag [#allocation3], 1
    %2661 = vsyncpa %s2660, 1

</llo_original>
